<compile_context>
chip_gen: v5e
topology: v5e:2x2
jax: 0.10.0
libtpu: 0.0.40
codegen_flags: <defaults>
</compile_context>

<pallas_src>
import functools

import numpy as np

import jax
import jax.numpy as jnp
from jax.experimental import pallas as pl
from jax.experimental.pallas import tpu as pltpu


def _round_up(v, m):
    return ((v + m - 1) // m) * m


# -----------------------------------------------------------------------------
# Fused kernel: GRU over time + frame selection + MLP + logits + softmax.
# -----------------------------------------------------------------------------
def _fused_kernel(T, B, Hp, NA, nh2,
                  x_ref, wih_ref, whh_ref, bih_ref, bhh_ref, sel_ref,
                  w1_ref, b1_ref, w2_ref, b2_ref, wo_ref, bo_ref,
                  out_ref, h_all, gi_all):
    # --- GRU input projection for ALL timesteps with one MXU matmul (no serial
    # dependence).  Result goes straight to a VMEM scratch so it is NOT a live
    # vreg value across the unrolled recurrence below.
    gi_all[...] = (jnp.dot(x_ref[...], wih_ref[...],
                           preferred_element_type=jnp.float32) + bih_ref[...])

    # --- recurrence: statically unrolled time loop.  PyTorch nn.GRU semantics
    # (h0 = 0, gate order [r, z, n]):
    #   r = sigmoid(Wx_r + Wh_r); z = sigmoid(Wx_z + Wh_z)
    #   n = tanh(Wx_n + r * Wh_n); h = (1-z)*n + z*h
    # whh/bhh are read from their VMEM refs each step (no large loop-invariant
    # values held live -> no spills on the serial path).
    h = jnp.zeros((B, Hp), dtype=jnp.float32)
    for t in range(T):
        gi = gi_all[t * B:(t + 1) * B, :]                       # VMEM load/step
        gh = (jnp.dot(h, whh_ref[...], preferred_element_type=jnp.float32)
              + bhh_ref[...])
        # gate slices land on 128-lane tile boundaries -> free views.
        r = jax.nn.sigmoid(gi[:, 0:Hp] + gh[:, 0:Hp])
        z = jax.nn.sigmoid(gi[:, Hp:2 * Hp] + gh[:, Hp:2 * Hp])
        n = jnp.tanh(gi[:, 2 * Hp:3 * Hp] + r * gh[:, 2 * Hp:3 * Hp])
        h = (1.0 - z) * n + z * h
        h_all[t * B:(t + 1) * B, :] = h          # hidden stream (T*B, Hp)

    # --- frame selection as a static-shape one-hot matmul (no dynamic gather)
    h_sel = jnp.dot(sel_ref[...], h_all[...],
                    preferred_element_type=jnp.float32)          # (K, Hp)

    # --- MLP (Linear+ReLU, Linear+ReLU) + output Linear + stable softmax
    a1 = jnp.maximum(
        jnp.dot(h_sel, w1_ref[...], preferred_element_type=jnp.float32)
        + b1_ref[...], 0.0)
    a2 = jnp.maximum(
        jnp.dot(a1, w2_ref[...], preferred_element_type=jnp.float32)
        + b2_ref[...], 0.0)
    logits = (jnp.dot(a2, wo_ref[...], preferred_element_type=jnp.float32)
              + bo_ref[...])
    m = jnp.max(logits, axis=1, keepdims=True)
    e = jnp.exp(logits - m)
    s = jnp.sum(e, axis=1, keepdims=True)
    c = e / s                                   # exact softmax (rows sum to 1)

    # --- lane-aligned packed output: [softmax | logits | feature], each on its
    # own 128-lane group -> single dense (K, 384) store, no lane shuffles.
    K = out_ref.shape[0]

    def pad128(a):
        w = a.shape[1]
        if w == 128:
            return a
        return jnp.concatenate([a, jnp.zeros((K, 128 - w), jnp.float32)], axis=1)

    out_ref[...] = jnp.concatenate([pad128(c), pad128(logits), pad128(a2)],
                                   axis=1)


def _run_fused(x2, prepped, sel, *, T, B, Hp, NA, nh2, K):
    kernel = functools.partial(_fused_kernel, T, B, Hp, NA, nh2)
    vmem = lambda: pl.BlockSpec(memory_space=pltpu.MemorySpace.VMEM)
    return pl.pallas_call(
        kernel,
        out_shape=jax.ShapeDtypeStruct((K, 3 * 128), jnp.float32),
        in_specs=[vmem() for _ in range(12)],
        out_specs=vmem(),
        scratch_shapes=[pltpu.VMEM((T * B, Hp), jnp.float32),        # hidden stream
                        pltpu.VMEM((T * B, 3 * Hp), jnp.float32)],   # gi_all
    )(x2, prepped["wih_p"], prepped["whh_p"], prepped["bih_p"], prepped["bhh_p"],
      sel, prepped["w1_p"], prepped["b1"], prepped["w2"], prepped["b2"],
      prepped["wo"], prepped["bo"])


# -----------------------------------------------------------------------------
# One-time weight preparation: each gate's output dim is padded from H to Hp
# (=128) so gate slices are tile-aligned.  Zero pads keep padded hidden columns
# exactly 0 through the recurrence.  Call ONCE per parameter set, not per step.
# -----------------------------------------------------------------------------
def prepare_params(params):
    H = params["gru_w_hh_t"].shape[0]
    Hp = _round_up(H, 128)
    nx = params["gru_w_ih_t"].shape[0]
    nh1 = params["mlp_w1_t"].shape[1]

    wih_p = jnp.zeros((nx, 3 * Hp), jnp.float32)
    whh_p = jnp.zeros((Hp, 3 * Hp), jnp.float32)
    bih_p = jnp.zeros((3 * Hp,), jnp.float32)
    bhh_p = jnp.zeros((3 * Hp,), jnp.float32)
    for g in range(3):
        wih_p = wih_p.at[:, g * Hp:g * Hp + H].set(
            params["gru_w_ih_t"][:, g * H:(g + 1) * H])
        whh_p = whh_p.at[:H, g * Hp:g * Hp + H].set(
            params["gru_w_hh_t"][:, g * H:(g + 1) * H])
        bih_p = bih_p.at[g * Hp:g * Hp + H].set(params["gru_b_ih"][g * H:(g + 1) * H])
        bhh_p = bhh_p.at[g * Hp:g * Hp + H].set(params["gru_b_hh"][g * H:(g + 1) * H])
    w1_p = jnp.zeros((Hp, nh1), jnp.float32).at[:H, :].set(params["mlp_w1_t"])

    return {
        "wih_p": wih_p, "whh_p": whh_p,
        "bih_p": bih_p.reshape(1, -1), "bhh_p": bhh_p.reshape(1, -1),
        "w1_p": w1_p, "b1": params["mlp_b1"].reshape(1, -1),
        "w2": params["mlp_w2_t"], "b2": params["mlp_b2"].reshape(1, -1),
        "wo": params["out_w_t"], "bo": params["out_b"].reshape(1, -1),
    }


# -----------------------------------------------------------------------------
# ActClassifier forward.  K (number of selected frames) is data dependent in
# the original module (boolean mask); pass it explicitly or provide fn as a
# host/numpy array so no device->host sync is needed per call.
# -----------------------------------------------------------------------------
@functools.partial(jax.jit, static_argnames=("K",))
def _forward_impl(prepped, x, fn, K):
    T, B, nx = x.shape
    Hp = prepped["whh_p"].shape[0]
    NA = prepped["wo"].shape[1]
    nh2 = prepped["w2"].shape[1]

    # h_x.transpose(0,1)[fn == 1] selection order == row-major order of (B, T).
    b_idx, t_idx = jnp.nonzero(fn, size=K)
    flat_idx = t_idx * B + b_idx                 # row index into (T*B, Hp) stream
    sel = jax.nn.one_hot(flat_idx, T * B, dtype=jnp.float32)    # (K, T*B)

    x2 = x.reshape(T * B, nx)                    # row = t*B + b (sequence-first)
    packed = _run_fused(x2, prepped, sel, T=T, B=B, Hp=Hp, NA=NA, nh2=nh2, K=K)
    c = packed[:, :NA]
    h = packed[:, 128:128 + NA]
    feat = packed[:, 256:256 + nh2]
    return c, h, feat


def act_classifier_forward(prepped, x, fn, is_feat=False, K=None):
    if K is None:
        # No sync if fn is a host/numpy array; pass K explicitly to be sure.
        K = int(np.asarray(fn).sum())
    NA = prepped["wo"].shape[1]
    nh2 = prepped["w2"].shape[1]
    if K == 0:
        z = jnp.zeros((0, NA), jnp.float32)
        f = jnp.zeros((0, nh2), jnp.float32)
        return (z, z, f) if is_feat else (z, z)
    c, h, feat = _forward_impl(prepped, jnp.asarray(x), jnp.asarray(fn), K)
    return (c, h, feat) if is_feat else (c, h)


# -----------------------------------------------------------------------------
# Parameter init (canonical, unpadded, transposed layout) + pure-JAX reference.
# -----------------------------------------------------------------------------
def init_params(key, nx, nh_rnn, nh_mlp, n_action):
    ks = jax.random.split(key, 10)
    s = 0.1
    return {
        # GRU: PyTorch stores (3H, nx)/(3H, H); we keep the transposed form.
        "gru_w_ih_t": (jax.random.normal(ks[0], (nx, 3 * nh_rnn)) * s).astype(jnp.float32),
        "gru_w_hh_t": (jax.random.normal(ks[1], (nh_rnn, 3 * nh_rnn)) * s).astype(jnp.float32),
        "gru_b_ih": (jax.random.normal(ks[2], (3 * nh_rnn,)) * s).astype(jnp.float32),
        "gru_b_hh": (jax.random.normal(ks[3], (3 * nh_rnn,)) * s).astype(jnp.float32),
        # MLP: nh_rnn -> nh_mlp[0] -> nh_mlp[1], relu after each layer.
        "mlp_w1_t": (jax.random.normal(ks[4], (nh_rnn, nh_mlp[0])) * s).astype(jnp.float32),
        "mlp_b1": (jax.random.normal(ks[5], (nh_mlp[0],)) * s).astype(jnp.float32),
        "mlp_w2_t": (jax.random.normal(ks[6], (nh_mlp[0], nh_mlp[1])) * s).astype(jnp.float32),
        "mlp_b2": (jax.random.normal(ks[7], (nh_mlp[1],)) * s).astype(jnp.float32),
        # c_out: Linear(nh_mlp[-1], n_action)
        "out_w_t": (jax.random.normal(ks[8], (nh_mlp[1], n_action)) * s).astype(jnp.float32),
        "out_b": (jax.random.normal(ks[9], (n_action,)) * s).astype(jnp.float32),
    }


def reference_forward(params, x, fn):
    """Pure-JAX reference (eager), mirrors the PyTorch module exactly."""
    T, B, _ = x.shape
    H = params["gru_w_hh_t"].shape[0]

    def step(h, x_t):
        gi = x_t @ params["gru_w_ih_t"] + params["gru_b_ih"]
        gh = h @ params["gru_w_hh_t"] + params["gru_b_hh"]
        r = jax.nn.sigmoid(gi[:, :H] + gh[:, :H])
        z = jax.nn.sigmoid(gi[:, H:2 * H] + gh[:, H:2 * H])
        n = jnp.tanh(gi[:, 2 * H:] + r * gh[:, 2 * H:])
        h_new = (1.0 - z) * n + z * h
        return h_new, h_new

    _, hs = jax.lax.scan(step, jnp.zeros((B, H), jnp.float32), x)
    h_bt = jnp.transpose(hs, (1, 0, 2))
    h_sel = h_bt[jnp.asarray(fn) == 1]
    a1 = jax.nn.relu(h_sel @ params["mlp_w1_t"] + params["mlp_b1"])
    a2 = jax.nn.relu(a1 @ params["mlp_w2_t"] + params["mlp_b2"])
    logits = a2 @ params["out_w_t"] + params["out_b"]
    c = jax.nn.softmax(logits, axis=1)
    return c, logits, a2


if __name__ == "__main__":
    # Small shapes consistent with the module:
    #   nx=32 (input feature dim), nh_rnn=32, nh_mlp=[64, 48], n_action=15,
    #   T=8 timesteps, B=8 batch.
    T, B, nx = 8, 8, 32
    nh_rnn, nh_mlp, n_action = 32, (64, 48), 15

    key = jax.random.PRNGKey(0)
    k_x, k_p = jax.random.split(key)
    x = jax.random.normal(k_x, (T, B, nx), dtype=jnp.float32)
    # frame mask (host-side, so no device->host sync for K):
    # select the last frame of every sequence.
    fn = np.zeros((B, T), dtype=np.int32)
    fn[:, -1] = 1

    params = init_params(k_p, nx, nh_rnn, nh_mlp, n_action)
    prepped = prepare_params(params)          # one-time weight padding

    c, h, feat = act_classifier_forward(prepped, x, fn, is_feat=True)
    (c, h, feat) = jax.block_until_ready((c, h, feat))

    # Correctness vs. pure-JAX reference.
    c_ref, h_ref, feat_ref = reference_forward(params, x, fn)
    assert c.shape == (B, n_action) and h.shape == (B, n_action)
    assert feat.shape == (B, nh_mlp[1])
    assert bool(jnp.all(jnp.abs(jnp.sum(c, axis=1) - 1.0) < 1e-4))
    assert bool(jnp.max(jnp.abs(h - h_ref)) < 1e-3)
    assert bool(jnp.max(jnp.abs(feat - feat_ref)) < 1e-3)
    assert bool(jnp.max(jnp.abs(c - c_ref)) < 1e-3)

    print("KERNEL_OK")
</pallas_src>

<mosaic_0001>
module attributes {stable_mosaic.version = 11 : i64} {
  func.func @_fused_kernel(%arg0: memref<64x32xf32, #tpu.memory_space<vmem>>, %arg1: memref<32x384xf32, #tpu.memory_space<vmem>>, %arg2: memref<128x384xf32, #tpu.memory_space<vmem>>, %arg3: memref<1x384xf32, #tpu.memory_space<vmem>>, %arg4: memref<1x384xf32, #tpu.memory_space<vmem>>, %arg5: memref<8x64xf32, #tpu.memory_space<vmem>>, %arg6: memref<128x64xf32, #tpu.memory_space<vmem>>, %arg7: memref<1x64xf32, #tpu.memory_space<vmem>>, %arg8: memref<64x48xf32, #tpu.memory_space<vmem>>, %arg9: memref<1x48xf32, #tpu.memory_space<vmem>>, %arg10: memref<48x15xf32, #tpu.memory_space<vmem>>, %arg11: memref<1x15xf32, #tpu.memory_space<vmem>>, %arg12: memref<8x384xf32, #tpu.memory_space<vmem>>, %arg13: memref<64x128xf32, #tpu.memory_space<vmem>>, %arg14: memref<64x384xf32, #tpu.memory_space<vmem>>) attributes {dimension_semantics = [], scalar_prefetch = 0 : i64, scratch_operands = 2 : i64, tpu.core_type = #tpu.core_type<tc>} {
    %c0 = arith.constant 0 : index
    %c0_0 = arith.constant 0 : index
    %0 = vector.load %arg0[%c0, %c0_0] : memref<64x32xf32, #tpu.memory_space<vmem>>, vector<64x32xf32>
    %c0_1 = arith.constant 0 : index
    %c0_2 = arith.constant 0 : index
    %1 = vector.load %arg1[%c0_1, %c0_2] : memref<32x384xf32, #tpu.memory_space<vmem>>, vector<32x384xf32>
    %cst = arith.constant dense<0.000000e+00> : vector<64x384xf32>
    %2 = tpu.matmul %0, %1, %cst {dimension_numbers = #tpu.dot_dimension_numbers<[1], [0], [0], [1], [0, 0, 1, 1], [], []>} : vector<64x32xf32>, vector<32x384xf32>, vector<64x384xf32> -> vector<64x384xf32>
    %c0_3 = arith.constant 0 : index
    %c0_4 = arith.constant 0 : index
    %3 = vector.load %arg3[%c0_3, %c0_4] : memref<1x384xf32, #tpu.memory_space<vmem>>, vector<1x384xf32>
    %4 = vector.broadcast %3 : vector<1x384xf32> to vector<64x384xf32>
    %5 = arith.addf %2, %4 : vector<64x384xf32>
    %c0_5 = arith.constant 0 : index
    %c0_6 = arith.constant 0 : index
    %6 = vector.load %arg14[%c0_5, %c0_6] : memref<64x384xf32, #tpu.memory_space<vmem>>, vector<64x384xf32>
    tpu.vector_store %arg14[%c0_5, %c0_6], %5 {strides = array<i32>} : memref<64x384xf32, #tpu.memory_space<vmem>>, vector<64x384xf32>,
    %cst_7 = arith.constant 0.000000e+00 : f32
    %7 = vector.broadcast %cst_7 : f32 to vector<8x128xf32>
    %c0_8 = arith.constant 0 : index
    %c0_9 = arith.constant 0 : index
    %8 = vector.load %arg14[%c0_8, %c0_9] : memref<64x384xf32, #tpu.memory_space<vmem>>, vector<8x384xf32>
    %c0_10 = arith.constant 0 : index
    %c0_11 = arith.constant 0 : index
    %9 = vector.load %arg2[%c0_10, %c0_11] : memref<128x384xf32, #tpu.memory_space<vmem>>, vector<128x384xf32>
    %cst_12 = arith.constant dense<0.000000e+00> : vector<8x384xf32>
    %10 = tpu.matmul %7, %9, %cst_12 {dimension_numbers = #tpu.dot_dimension_numbers<[1], [0], [0], [1], [0, 0, 1, 1], [], []>} : vector<8x128xf32>, vector<128x384xf32>, vector<8x384xf32> -> vector<8x384xf32>
    %c0_13 = arith.constant 0 : index
    %c0_14 = arith.constant 0 : index
    %11 = vector.load %arg4[%c0_13, %c0_14] : memref<1x384xf32, #tpu.memory_space<vmem>>, vector<1x384xf32>
    %12 = vector.broadcast %11 : vector<1x384xf32> to vector<8x384xf32>
    %13 = arith.addf %10, %12 : vector<8x384xf32>
    %14 = vector.extract_strided_slice %8 {offsets = [0, 0], sizes = [8, 128], strides = [1, 1]} : vector<8x384xf32> to vector<8x128xf32>
    %15 = vector.extract_strided_slice %13 {offsets = [0, 0], sizes = [8, 128], strides = [1, 1]} : vector<8x384xf32> to vector<8x128xf32>
    %16 = arith.addf %14, %15 : vector<8x128xf32>
    %17 = arith.negf %16 : vector<8x128xf32>
    %18 = math.exp %17 : vector<8x128xf32>
    %cst_15 = arith.constant 1.000000e+00 : f32
    %19 = vector.broadcast %cst_15 : f32 to vector<8x128xf32>
    %20 = arith.addf %19, %18 : vector<8x128xf32>
    %21 = arith.divf %19, %20 : vector<8x128xf32>
    %22 = vector.extract_strided_slice %8 {offsets = [0, 128], sizes = [8, 128], strides = [1, 1]} : vector<8x384xf32> to vector<8x128xf32>
    %23 = vector.extract_strided_slice %13 {offsets = [0, 128], sizes = [8, 128], strides = [1, 1]} : vector<8x384xf32> to vector<8x128xf32>
    %24 = arith.addf %22, %23 : vector<8x128xf32>
    %25 = arith.negf %24 : vector<8x128xf32>
    %26 = math.exp %25 : vector<8x128xf32>
    %cst_16 = arith.constant 1.000000e+00 : f32
    %27 = vector.broadcast %cst_16 : f32 to vector<8x128xf32>
    %28 = arith.addf %27, %26 : vector<8x128xf32>
    %29 = arith.divf %27, %28 : vector<8x128xf32>
    %30 = vector.extract_strided_slice %8 {offsets = [0, 256], sizes = [8, 128], strides = [1, 1]} : vector<8x384xf32> to vector<8x128xf32>
    %31 = vector.extract_strided_slice %13 {offsets = [0, 256], sizes = [8, 128], strides = [1, 1]} : vector<8x384xf32> to vector<8x128xf32>
    %32 = arith.mulf %21, %31 : vector<8x128xf32>
    %33 = arith.addf %30, %32 : vector<8x128xf32>
    %34 = math.tanh %33 : vector<8x128xf32>
    %cst_17 = arith.constant 1.000000e+00 : f32
    %35 = vector.broadcast %cst_17 : f32 to vector<8x128xf32>
    %36 = arith.subf %35, %29 : vector<8x128xf32>
    %37 = arith.mulf %36, %34 : vector<8x128xf32>
    %38 = arith.mulf %29, %7 : vector<8x128xf32>
    %39 = arith.addf %37, %38 : vector<8x128xf32>
    %c0_18 = arith.constant 0 : index
    %c0_19 = arith.constant 0 : index
    %40 = vector.load %arg13[%c0_18, %c0_19] : memref<64x128xf32, #tpu.memory_space<vmem>>, vector<8x128xf32>
    tpu.vector_store %arg13[%c0_18, %c0_19], %39 {strides = array<i32>} : memref<64x128xf32, #tpu.memory_space<vmem>>, vector<8x128xf32>,
    %c8 = arith.constant 8 : index
    %c0_20 = arith.constant 0 : index
    %41 = vector.load %arg14[%c8, %c0_20] : memref<64x384xf32, #tpu.memory_space<vmem>>, vector<8x384xf32>
    %c0_21 = arith.constant 0 : index
    %c0_22 = arith.constant 0 : index
    %42 = vector.load %arg2[%c0_21, %c0_22] : memref<128x384xf32, #tpu.memory_space<vmem>>, vector<128x384xf32>
    %cst_23 = arith.constant dense<0.000000e+00> : vector<8x384xf32>
    %43 = tpu.matmul %39, %42, %cst_23 {dimension_numbers = #tpu.dot_dimension_numbers<[1], [0], [0], [1], [0, 0, 1, 1], [], []>} : vector<8x128xf32>, vector<128x384xf32>, vector<8x384xf32> -> vector<8x384xf32>
    %c0_24 = arith.constant 0 : index
    %c0_25 = arith.constant 0 : index
    %44 = vector.load %arg4[%c0_24, %c0_25] : memref<1x384xf32, #tpu.memory_space<vmem>>, vector<1x384xf32>
    %45 = vector.broadcast %44 : vector<1x384xf32> to vector<8x384xf32>
    %46 = arith.addf %43, %45 : vector<8x384xf32>
    %47 = vector.extract_strided_slice %41 {offsets = [0, 0], sizes = [8, 128], strides = [1, 1]} : vector<8x384xf32> to vector<8x128xf32>
    %48 = vector.extract_strided_slice %46 {offsets = [0, 0], sizes = [8, 128], strides = [1, 1]} : vector<8x384xf32> to vector<8x128xf32>
    %49 = arith.addf %47, %48 : vector<8x128xf32>
    %50 = arith.negf %49 : vector<8x128xf32>
    %51 = math.exp %50 : vector<8x128xf32>
    %cst_26 = arith.constant 1.000000e+00 : f32
    %52 = vector.broadcast %cst_26 : f32 to vector<8x128xf32>
    %53 = arith.addf %52, %51 : vector<8x128xf32>
    %54 = arith.divf %52, %53 : vector<8x128xf32>
    %55 = vector.extract_strided_slice %41 {offsets = [0, 128], sizes = [8, 128], strides = [1, 1]} : vector<8x384xf32> to vector<8x128xf32>
    %56 = vector.extract_strided_slice %46 {offsets = [0, 128], sizes = [8, 128], strides = [1, 1]} : vector<8x384xf32> to vector<8x128xf32>
    %57 = arith.addf %55, %56 : vector<8x128xf32>
    %58 = arith.negf %57 : vector<8x128xf32>
    %59 = math.exp %58 : vector<8x128xf32>
    %cst_27 = arith.constant 1.000000e+00 : f32
    %60 = vector.broadcast %cst_27 : f32 to vector<8x128xf32>
    %61 = arith.addf %60, %59 : vector<8x128xf32>
    %62 = arith.divf %60, %61 : vector<8x128xf32>
    %63 = vector.extract_strided_slice %41 {offsets = [0, 256], sizes = [8, 128], strides = [1, 1]} : vector<8x384xf32> to vector<8x128xf32>
    %64 = vector.extract_strided_slice %46 {offsets = [0, 256], sizes = [8, 128], strides = [1, 1]} : vector<8x384xf32> to vector<8x128xf32>
    %65 = arith.mulf %54, %64 : vector<8x128xf32>
    %66 = arith.addf %63, %65 : vector<8x128xf32>
    %67 = math.tanh %66 : vector<8x128xf32>
    %cst_28 = arith.constant 1.000000e+00 : f32
    %68 = vector.broadcast %cst_28 : f32 to vector<8x128xf32>
    %69 = arith.subf %68, %62 : vector<8x128xf32>
    %70 = arith.mulf %69, %67 : vector<8x128xf32>
    %71 = arith.mulf %62, %39 : vector<8x128xf32>
    %72 = arith.addf %70, %71 : vector<8x128xf32>
    %c8_29 = arith.constant 8 : index
    %c0_30 = arith.constant 0 : index
    %73 = vector.load %arg13[%c8_29, %c0_30] : memref<64x128xf32, #tpu.memory_space<vmem>>, vector<8x128xf32>
    tpu.vector_store %arg13[%c8_29, %c0_30], %72 {strides = array<i32>} : memref<64x128xf32, #tpu.memory_space<vmem>>, vector<8x128xf32>,
    %c16 = arith.constant 16 : index
    %c0_31 = arith.constant 0 : index
    %74 = vector.load %arg14[%c16, %c0_31] : memref<64x384xf32, #tpu.memory_space<vmem>>, vector<8x384xf32>
    %c0_32 = arith.constant 0 : index
    %c0_33 = arith.constant 0 : index
    %75 = vector.load %arg2[%c0_32, %c0_33] : memref<128x384xf32, #tpu.memory_space<vmem>>, vector<128x384xf32>
    %cst_34 = arith.constant dense<0.000000e+00> : vector<8x384xf32>
    %76 = tpu.matmul %72, %75, %cst_34 {dimension_numbers = #tpu.dot_dimension_numbers<[1], [0], [0], [1], [0, 0, 1, 1], [], []>} : vector<8x128xf32>, vector<128x384xf32>, vector<8x384xf32> -> vector<8x384xf32>
    %c0_35 = arith.constant 0 : index
    %c0_36 = arith.constant 0 : index
    %77 = vector.load %arg4[%c0_35, %c0_36] : memref<1x384xf32, #tpu.memory_space<vmem>>, vector<1x384xf32>
    %78 = vector.broadcast %77 : vector<1x384xf32> to vector<8x384xf32>
    %79 = arith.addf %76, %78 : vector<8x384xf32>
    %80 = vector.extract_strided_slice %74 {offsets = [0, 0], sizes = [8, 128], strides = [1, 1]} : vector<8x384xf32> to vector<8x128xf32>
    %81 = vector.extract_strided_slice %79 {offsets = [0, 0], sizes = [8, 128], strides = [1, 1]} : vector<8x384xf32> to vector<8x128xf32>
    %82 = arith.addf %80, %81 : vector<8x128xf32>
    %83 = arith.negf %82 : vector<8x128xf32>
    %84 = math.exp %83 : vector<8x128xf32>
    %cst_37 = arith.constant 1.000000e+00 : f32
    %85 = vector.broadcast %cst_37 : f32 to vector<8x128xf32>
    %86 = arith.addf %85, %84 : vector<8x128xf32>
    %87 = arith.divf %85, %86 : vector<8x128xf32>
    %88 = vector.extract_strided_slice %74 {offsets = [0, 128], sizes = [8, 128], strides = [1, 1]} : vector<8x384xf32> to vector<8x128xf32>
    %89 = vector.extract_strided_slice %79 {offsets = [0, 128], sizes = [8, 128], strides = [1, 1]} : vector<8x384xf32> to vector<8x128xf32>
    %90 = arith.addf %88, %89 : vector<8x128xf32>
    %91 = arith.negf %90 : vector<8x128xf32>
    %92 = math.exp %91 : vector<8x128xf32>
    %cst_38 = arith.constant 1.000000e+00 : f32
    %93 = vector.broadcast %cst_38 : f32 to vector<8x128xf32>
    %94 = arith.addf %93, %92 : vector<8x128xf32>
    %95 = arith.divf %93, %94 : vector<8x128xf32>
    %96 = vector.extract_strided_slice %74 {offsets = [0, 256], sizes = [8, 128], strides = [1, 1]} : vector<8x384xf32> to vector<8x128xf32>
    %97 = vector.extract_strided_slice %79 {offsets = [0, 256], sizes = [8, 128], strides = [1, 1]} : vector<8x384xf32> to vector<8x128xf32>
    %98 = arith.mulf %87, %97 : vector<8x128xf32>
    %99 = arith.addf %96, %98 : vector<8x128xf32>
    %100 = math.tanh %99 : vector<8x128xf32>
    %cst_39 = arith.constant 1.000000e+00 : f32
    %101 = vector.broadcast %cst_39 : f32 to vector<8x128xf32>
    %102 = arith.subf %101, %95 : vector<8x128xf32>
    %103 = arith.mulf %102, %100 : vector<8x128xf32>
    %104 = arith.mulf %95, %72 : vector<8x128xf32>
    %105 = arith.addf %103, %104 : vector<8x128xf32>
    %c16_40 = arith.constant 16 : index
    %c0_41 = arith.constant 0 : index
    %106 = vector.load %arg13[%c16_40, %c0_41] : memref<64x128xf32, #tpu.memory_space<vmem>>, vector<8x128xf32>
    tpu.vector_store %arg13[%c16_40, %c0_41], %105 {strides = array<i32>} : memref<64x128xf32, #tpu.memory_space<vmem>>, vector<8x128xf32>,
    %c24 = arith.constant 24 : index
    %c0_42 = arith.constant 0 : index
    %107 = vector.load %arg14[%c24, %c0_42] : memref<64x384xf32, #tpu.memory_space<vmem>>, vector<8x384xf32>
    %c0_43 = arith.constant 0 : index
    %c0_44 = arith.constant 0 : index
    %108 = vector.load %arg2[%c0_43, %c0_44] : memref<128x384xf32, #tpu.memory_space<vmem>>, vector<128x384xf32>
    %cst_45 = arith.constant dense<0.000000e+00> : vector<8x384xf32>
    %109 = tpu.matmul %105, %108, %cst_45 {dimension_numbers = #tpu.dot_dimension_numbers<[1], [0], [0], [1], [0, 0, 1, 1], [], []>} : vector<8x128xf32>, vector<128x384xf32>, vector<8x384xf32> -> vector<8x384xf32>
    %c0_46 = arith.constant 0 : index
    %c0_47 = arith.constant 0 : index
    %110 = vector.load %arg4[%c0_46, %c0_47] : memref<1x384xf32, #tpu.memory_space<vmem>>, vector<1x384xf32>
    %111 = vector.broadcast %110 : vector<1x384xf32> to vector<8x384xf32>
    %112 = arith.addf %109, %111 : vector<8x384xf32>
    %113 = vector.extract_strided_slice %107 {offsets = [0, 0], sizes = [8, 128], strides = [1, 1]} : vector<8x384xf32> to vector<8x128xf32>
    %114 = vector.extract_strided_slice %112 {offsets = [0, 0], sizes = [8, 128], strides = [1, 1]} : vector<8x384xf32> to vector<8x128xf32>
    %115 = arith.addf %113, %114 : vector<8x128xf32>
    %116 = arith.negf %115 : vector<8x128xf32>
    %117 = math.exp %116 : vector<8x128xf32>
    %cst_48 = arith.constant 1.000000e+00 : f32
    %118 = vector.broadcast %cst_48 : f32 to vector<8x128xf32>
    %119 = arith.addf %118, %117 : vector<8x128xf32>
    %120 = arith.divf %118, %119 : vector<8x128xf32>
    %121 = vector.extract_strided_slice %107 {offsets = [0, 128], sizes = [8, 128], strides = [1, 1]} : vector<8x384xf32> to vector<8x128xf32>
    %122 = vector.extract_strided_slice %112 {offsets = [0, 128], sizes = [8, 128], strides = [1, 1]} : vector<8x384xf32> to vector<8x128xf32>
    %123 = arith.addf %121, %122 : vector<8x128xf32>
    %124 = arith.negf %123 : vector<8x128xf32>
    %125 = math.exp %124 : vector<8x128xf32>
    %cst_49 = arith.constant 1.000000e+00 : f32
    %126 = vector.broadcast %cst_49 : f32 to vector<8x128xf32>
    %127 = arith.addf %126, %125 : vector<8x128xf32>
    %128 = arith.divf %126, %127 : vector<8x128xf32>
    %129 = vector.extract_strided_slice %107 {offsets = [0, 256], sizes = [8, 128], strides = [1, 1]} : vector<8x384xf32> to vector<8x128xf32>
    %130 = vector.extract_strided_slice %112 {offsets = [0, 256], sizes = [8, 128], strides = [1, 1]} : vector<8x384xf32> to vector<8x128xf32>
    %131 = arith.mulf %120, %130 : vector<8x128xf32>
    %132 = arith.addf %129, %131 : vector<8x128xf32>
    %133 = math.tanh %132 : vector<8x128xf32>
    %cst_50 = arith.constant 1.000000e+00 : f32
    %134 = vector.broadcast %cst_50 : f32 to vector<8x128xf32>
    %135 = arith.subf %134, %128 : vector<8x128xf32>
    %136 = arith.mulf %135, %133 : vector<8x128xf32>
    %137 = arith.mulf %128, %105 : vector<8x128xf32>
    %138 = arith.addf %136, %137 : vector<8x128xf32>
    %c24_51 = arith.constant 24 : index
    %c0_52 = arith.constant 0 : index
    %139 = vector.load %arg13[%c24_51, %c0_52] : memref<64x128xf32, #tpu.memory_space<vmem>>, vector<8x128xf32>
    tpu.vector_store %arg13[%c24_51, %c0_52], %138 {strides = array<i32>} : memref<64x128xf32, #tpu.memory_space<vmem>>, vector<8x128xf32>,
    %c32 = arith.constant 32 : index
    %c0_53 = arith.constant 0 : index
    %140 = vector.load %arg14[%c32, %c0_53] : memref<64x384xf32, #tpu.memory_space<vmem>>, vector<8x384xf32>
    %c0_54 = arith.constant 0 : index
    %c0_55 = arith.constant 0 : index
    %141 = vector.load %arg2[%c0_54, %c0_55] : memref<128x384xf32, #tpu.memory_space<vmem>>, vector<128x384xf32>
    %cst_56 = arith.constant dense<0.000000e+00> : vector<8x384xf32>
    %142 = tpu.matmul %138, %141, %cst_56 {dimension_numbers = #tpu.dot_dimension_numbers<[1], [0], [0], [1], [0, 0, 1, 1], [], []>} : vector<8x128xf32>, vector<128x384xf32>, vector<8x384xf32> -> vector<8x384xf32>
    %c0_57 = arith.constant 0 : index
    %c0_58 = arith.constant 0 : index
    %143 = vector.load %arg4[%c0_57, %c0_58] : memref<1x384xf32, #tpu.memory_space<vmem>>, vector<1x384xf32>
    %144 = vector.broadcast %143 : vector<1x384xf32> to vector<8x384xf32>
    %145 = arith.addf %142, %144 : vector<8x384xf32>
    %146 = vector.extract_strided_slice %140 {offsets = [0, 0], sizes = [8, 128], strides = [1, 1]} : vector<8x384xf32> to vector<8x128xf32>
    %147 = vector.extract_strided_slice %145 {offsets = [0, 0], sizes = [8, 128], strides = [1, 1]} : vector<8x384xf32> to vector<8x128xf32>
    %148 = arith.addf %146, %147 : vector<8x128xf32>
    %149 = arith.negf %148 : vector<8x128xf32>
    %150 = math.exp %149 : vector<8x128xf32>
    %cst_59 = arith.constant 1.000000e+00 : f32
    %151 = vector.broadcast %cst_59 : f32 to vector<8x128xf32>
    %152 = arith.addf %151, %150 : vector<8x128xf32>
    %153 = arith.divf %151, %152 : vector<8x128xf32>
    %154 = vector.extract_strided_slice %140 {offsets = [0, 128], sizes = [8, 128], strides = [1, 1]} : vector<8x384xf32> to vector<8x128xf32>
    %155 = vector.extract_strided_slice %145 {offsets = [0, 128], sizes = [8, 128], strides = [1, 1]} : vector<8x384xf32> to vector<8x128xf32>
    %156 = arith.addf %154, %155 : vector<8x128xf32>
    %157 = arith.negf %156 : vector<8x128xf32>
    %158 = math.exp %157 : vector<8x128xf32>
    %cst_60 = arith.constant 1.000000e+00 : f32
    %159 = vector.broadcast %cst_60 : f32 to vector<8x128xf32>
    %160 = arith.addf %159, %158 : vector<8x128xf32>
    %161 = arith.divf %159, %160 : vector<8x128xf32>
    %162 = vector.extract_strided_slice %140 {offsets = [0, 256], sizes = [8, 128], strides = [1, 1]} : vector<8x384xf32> to vector<8x128xf32>
    %163 = vector.extract_strided_slice %145 {offsets = [0, 256], sizes = [8, 128], strides = [1, 1]} : vector<8x384xf32> to vector<8x128xf32>
    %164 = arith.mulf %153, %163 : vector<8x128xf32>
    %165 = arith.addf %162, %164 : vector<8x128xf32>
    %166 = math.tanh %165 : vector<8x128xf32>
    %cst_61 = arith.constant 1.000000e+00 : f32
    %167 = vector.broadcast %cst_61 : f32 to vector<8x128xf32>
    %168 = arith.subf %167, %161 : vector<8x128xf32>
    %169 = arith.mulf %168, %166 : vector<8x128xf32>
    %170 = arith.mulf %161, %138 : vector<8x128xf32>
    %171 = arith.addf %169, %170 : vector<8x128xf32>
    %c32_62 = arith.constant 32 : index
    %c0_63 = arith.constant 0 : index
    %172 = vector.load %arg13[%c32_62, %c0_63] : memref<64x128xf32, #tpu.memory_space<vmem>>, vector<8x128xf32>
    tpu.vector_store %arg13[%c32_62, %c0_63], %171 {strides = array<i32>} : memref<64x128xf32, #tpu.memory_space<vmem>>, vector<8x128xf32>,
    %c40 = arith.constant 40 : index
    %c0_64 = arith.constant 0 : index
    %173 = vector.load %arg14[%c40, %c0_64] : memref<64x384xf32, #tpu.memory_space<vmem>>, vector<8x384xf32>
    %c0_65 = arith.constant 0 : index
    %c0_66 = arith.constant 0 : index
    %174 = vector.load %arg2[%c0_65, %c0_66] : memref<128x384xf32, #tpu.memory_space<vmem>>, vector<128x384xf32>
    %cst_67 = arith.constant dense<0.000000e+00> : vector<8x384xf32>
    %175 = tpu.matmul %171, %174, %cst_67 {dimension_numbers = #tpu.dot_dimension_numbers<[1], [0], [0], [1], [0, 0, 1, 1], [], []>} : vector<8x128xf32>, vector<128x384xf32>, vector<8x384xf32> -> vector<8x384xf32>
    %c0_68 = arith.constant 0 : index
    %c0_69 = arith.constant 0 : index
    %176 = vector.load %arg4[%c0_68, %c0_69] : memref<1x384xf32, #tpu.memory_space<vmem>>, vector<1x384xf32>
    %177 = vector.broadcast %176 : vector<1x384xf32> to vector<8x384xf32>
    %178 = arith.addf %175, %177 : vector<8x384xf32>
    %179 = vector.extract_strided_slice %173 {offsets = [0, 0], sizes = [8, 128], strides = [1, 1]} : vector<8x384xf32> to vector<8x128xf32>
    %180 = vector.extract_strided_slice %178 {offsets = [0, 0], sizes = [8, 128], strides = [1, 1]} : vector<8x384xf32> to vector<8x128xf32>
    %181 = arith.addf %179, %180 : vector<8x128xf32>
    %182 = arith.negf %181 : vector<8x128xf32>
    %183 = math.exp %182 : vector<8x128xf32>
    %cst_70 = arith.constant 1.000000e+00 : f32
    %184 = vector.broadcast %cst_70 : f32 to vector<8x128xf32>
    %185 = arith.addf %184, %183 : vector<8x128xf32>
    %186 = arith.divf %184, %185 : vector<8x128xf32>
    %187 = vector.extract_strided_slice %173 {offsets = [0, 128], sizes = [8, 128], strides = [1, 1]} : vector<8x384xf32> to vector<8x128xf32>
    %188 = vector.extract_strided_slice %178 {offsets = [0, 128], sizes = [8, 128], strides = [1, 1]} : vector<8x384xf32> to vector<8x128xf32>
    %189 = arith.addf %187, %188 : vector<8x128xf32>
    %190 = arith.negf %189 : vector<8x128xf32>
    %191 = math.exp %190 : vector<8x128xf32>
    %cst_71 = arith.constant 1.000000e+00 : f32
    %192 = vector.broadcast %cst_71 : f32 to vector<8x128xf32>
    %193 = arith.addf %192, %191 : vector<8x128xf32>
    %194 = arith.divf %192, %193 : vector<8x128xf32>
    %195 = vector.extract_strided_slice %173 {offsets = [0, 256], sizes = [8, 128], strides = [1, 1]} : vector<8x384xf32> to vector<8x128xf32>
    %196 = vector.extract_strided_slice %178 {offsets = [0, 256], sizes = [8, 128], strides = [1, 1]} : vector<8x384xf32> to vector<8x128xf32>
    %197 = arith.mulf %186, %196 : vector<8x128xf32>
    %198 = arith.addf %195, %197 : vector<8x128xf32>
    %199 = math.tanh %198 : vector<8x128xf32>
    %cst_72 = arith.constant 1.000000e+00 : f32
    %200 = vector.broadcast %cst_72 : f32 to vector<8x128xf32>
    %201 = arith.subf %200, %194 : vector<8x128xf32>
    %202 = arith.mulf %201, %199 : vector<8x128xf32>
    %203 = arith.mulf %194, %171 : vector<8x128xf32>
    %204 = arith.addf %202, %203 : vector<8x128xf32>
    %c40_73 = arith.constant 40 : index
    %c0_74 = arith.constant 0 : index
    %205 = vector.load %arg13[%c40_73, %c0_74] : memref<64x128xf32, #tpu.memory_space<vmem>>, vector<8x128xf32>
    tpu.vector_store %arg13[%c40_73, %c0_74], %204 {strides = array<i32>} : memref<64x128xf32, #tpu.memory_space<vmem>>, vector<8x128xf32>,
    %c48 = arith.constant 48 : index
    %c0_75 = arith.constant 0 : index
    %206 = vector.load %arg14[%c48, %c0_75] : memref<64x384xf32, #tpu.memory_space<vmem>>, vector<8x384xf32>
    %c0_76 = arith.constant 0 : index
    %c0_77 = arith.constant 0 : index
    %207 = vector.load %arg2[%c0_76, %c0_77] : memref<128x384xf32, #tpu.memory_space<vmem>>, vector<128x384xf32>
    %cst_78 = arith.constant dense<0.000000e+00> : vector<8x384xf32>
    %208 = tpu.matmul %204, %207, %cst_78 {dimension_numbers = #tpu.dot_dimension_numbers<[1], [0], [0], [1], [0, 0, 1, 1], [], []>} : vector<8x128xf32>, vector<128x384xf32>, vector<8x384xf32> -> vector<8x384xf32>
    %c0_79 = arith.constant 0 : index
    %c0_80 = arith.constant 0 : index
    %209 = vector.load %arg4[%c0_79, %c0_80] : memref<1x384xf32, #tpu.memory_space<vmem>>, vector<1x384xf32>
    %210 = vector.broadcast %209 : vector<1x384xf32> to vector<8x384xf32>
    %211 = arith.addf %208, %210 : vector<8x384xf32>
    %212 = vector.extract_strided_slice %206 {offsets = [0, 0], sizes = [8, 128], strides = [1, 1]} : vector<8x384xf32> to vector<8x128xf32>
    %213 = vector.extract_strided_slice %211 {offsets = [0, 0], sizes = [8, 128], strides = [1, 1]} : vector<8x384xf32> to vector<8x128xf32>
    %214 = arith.addf %212, %213 : vector<8x128xf32>
    %215 = arith.negf %214 : vector<8x128xf32>
    %216 = math.exp %215 : vector<8x128xf32>
    %cst_81 = arith.constant 1.000000e+00 : f32
    %217 = vector.broadcast %cst_81 : f32 to vector<8x128xf32>
    %218 = arith.addf %217, %216 : vector<8x128xf32>
    %219 = arith.divf %217, %218 : vector<8x128xf32>
    %220 = vector.extract_strided_slice %206 {offsets = [0, 128], sizes = [8, 128], strides = [1, 1]} : vector<8x384xf32> to vector<8x128xf32>
    %221 = vector.extract_strided_slice %211 {offsets = [0, 128], sizes = [8, 128], strides = [1, 1]} : vector<8x384xf32> to vector<8x128xf32>
    %222 = arith.addf %220, %221 : vector<8x128xf32>
    %223 = arith.negf %222 : vector<8x128xf32>
    %224 = math.exp %223 : vector<8x128xf32>
    %cst_82 = arith.constant 1.000000e+00 : f32
    %225 = vector.broadcast %cst_82 : f32 to vector<8x128xf32>
    %226 = arith.addf %225, %224 : vector<8x128xf32>
    %227 = arith.divf %225, %226 : vector<8x128xf32>
    %228 = vector.extract_strided_slice %206 {offsets = [0, 256], sizes = [8, 128], strides = [1, 1]} : vector<8x384xf32> to vector<8x128xf32>
    %229 = vector.extract_strided_slice %211 {offsets = [0, 256], sizes = [8, 128], strides = [1, 1]} : vector<8x384xf32> to vector<8x128xf32>
    %230 = arith.mulf %219, %229 : vector<8x128xf32>
    %231 = arith.addf %228, %230 : vector<8x128xf32>
    %232 = math.tanh %231 : vector<8x128xf32>
    %cst_83 = arith.constant 1.000000e+00 : f32
    %233 = vector.broadcast %cst_83 : f32 to vector<8x128xf32>
    %234 = arith.subf %233, %227 : vector<8x128xf32>
    %235 = arith.mulf %234, %232 : vector<8x128xf32>
    %236 = arith.mulf %227, %204 : vector<8x128xf32>
    %237 = arith.addf %235, %236 : vector<8x128xf32>
    %c48_84 = arith.constant 48 : index
    %c0_85 = arith.constant 0 : index
    %238 = vector.load %arg13[%c48_84, %c0_85] : memref<64x128xf32, #tpu.memory_space<vmem>>, vector<8x128xf32>
    tpu.vector_store %arg13[%c48_84, %c0_85], %237 {strides = array<i32>} : memref<64x128xf32, #tpu.memory_space<vmem>>, vector<8x128xf32>,
    %c56 = arith.constant 56 : index
    %c0_86 = arith.constant 0 : index
    %239 = vector.load %arg14[%c56, %c0_86] : memref<64x384xf32, #tpu.memory_space<vmem>>, vector<8x384xf32>
    %c0_87 = arith.constant 0 : index
    %c0_88 = arith.constant 0 : index
    %240 = vector.load %arg2[%c0_87, %c0_88] : memref<128x384xf32, #tpu.memory_space<vmem>>, vector<128x384xf32>
    %cst_89 = arith.constant dense<0.000000e+00> : vector<8x384xf32>
    %241 = tpu.matmul %237, %240, %cst_89 {dimension_numbers = #tpu.dot_dimension_numbers<[1], [0], [0], [1], [0, 0, 1, 1], [], []>} : vector<8x128xf32>, vector<128x384xf32>, vector<8x384xf32> -> vector<8x384xf32>
    %c0_90 = arith.constant 0 : index
    %c0_91 = arith.constant 0 : index
    %242 = vector.load %arg4[%c0_90, %c0_91] : memref<1x384xf32, #tpu.memory_space<vmem>>, vector<1x384xf32>
    %243 = vector.broadcast %242 : vector<1x384xf32> to vector<8x384xf32>
    %244 = arith.addf %241, %243 : vector<8x384xf32>
    %245 = vector.extract_strided_slice %239 {offsets = [0, 0], sizes = [8, 128], strides = [1, 1]} : vector<8x384xf32> to vector<8x128xf32>
    %246 = vector.extract_strided_slice %244 {offsets = [0, 0], sizes = [8, 128], strides = [1, 1]} : vector<8x384xf32> to vector<8x128xf32>
    %247 = arith.addf %245, %246 : vector<8x128xf32>
    %248 = arith.negf %247 : vector<8x128xf32>
    %249 = math.exp %248 : vector<8x128xf32>
    %cst_92 = arith.constant 1.000000e+00 : f32
    %250 = vector.broadcast %cst_92 : f32 to vector<8x128xf32>
    %251 = arith.addf %250, %249 : vector<8x128xf32>
    %252 = arith.divf %250, %251 : vector<8x128xf32>
    %253 = vector.extract_strided_slice %239 {offsets = [0, 128], sizes = [8, 128], strides = [1, 1]} : vector<8x384xf32> to vector<8x128xf32>
    %254 = vector.extract_strided_slice %244 {offsets = [0, 128], sizes = [8, 128], strides = [1, 1]} : vector<8x384xf32> to vector<8x128xf32>
    %255 = arith.addf %253, %254 : vector<8x128xf32>
    %256 = arith.negf %255 : vector<8x128xf32>
    %257 = math.exp %256 : vector<8x128xf32>
    %cst_93 = arith.constant 1.000000e+00 : f32
    %258 = vector.broadcast %cst_93 : f32 to vector<8x128xf32>
    %259 = arith.addf %258, %257 : vector<8x128xf32>
    %260 = arith.divf %258, %259 : vector<8x128xf32>
    %261 = vector.extract_strided_slice %239 {offsets = [0, 256], sizes = [8, 128], strides = [1, 1]} : vector<8x384xf32> to vector<8x128xf32>
    %262 = vector.extract_strided_slice %244 {offsets = [0, 256], sizes = [8, 128], strides = [1, 1]} : vector<8x384xf32> to vector<8x128xf32>
    %263 = arith.mulf %252, %262 : vector<8x128xf32>
    %264 = arith.addf %261, %263 : vector<8x128xf32>
    %265 = math.tanh %264 : vector<8x128xf32>
    %cst_94 = arith.constant 1.000000e+00 : f32
    %266 = vector.broadcast %cst_94 : f32 to vector<8x128xf32>
    %267 = arith.subf %266, %260 : vector<8x128xf32>
    %268 = arith.mulf %267, %265 : vector<8x128xf32>
    %269 = arith.mulf %260, %237 : vector<8x128xf32>
    %270 = arith.addf %268, %269 : vector<8x128xf32>
    %c56_95 = arith.constant 56 : index
    %c0_96 = arith.constant 0 : index
    %271 = vector.load %arg13[%c56_95, %c0_96] : memref<64x128xf32, #tpu.memory_space<vmem>>, vector<8x128xf32>
    tpu.vector_store %arg13[%c56_95, %c0_96], %270 {strides = array<i32>} : memref<64x128xf32, #tpu.memory_space<vmem>>, vector<8x128xf32>,
    %c0_97 = arith.constant 0 : index
    %c0_98 = arith.constant 0 : index
    %272 = vector.load %arg5[%c0_97, %c0_98] : memref<8x64xf32, #tpu.memory_space<vmem>>, vector<8x64xf32>
    %c0_99 = arith.constant 0 : index
    %c0_100 = arith.constant 0 : index
    %273 = vector.load %arg13[%c0_99, %c0_100] : memref<64x128xf32, #tpu.memory_space<vmem>>, vector<64x128xf32>
    %cst_101 = arith.constant dense<0.000000e+00> : vector<8x128xf32>
    %274 = tpu.matmul %272, %273, %cst_101 {dimension_numbers = #tpu.dot_dimension_numbers<[1], [0], [0], [1], [0, 0, 1, 1], [], []>} : vector<8x64xf32>, vector<64x128xf32>, vector<8x128xf32> -> vector<8x128xf32>
    %c0_102 = arith.constant 0 : index
    %c0_103 = arith.constant 0 : index
    %275 = vector.load %arg6[%c0_102, %c0_103] : memref<128x64xf32, #tpu.memory_space<vmem>>, vector<128x64xf32>
    %cst_104 = arith.constant dense<0.000000e+00> : vector<8x64xf32>
    %276 = tpu.matmul %274, %275, %cst_104 {dimension_numbers = #tpu.dot_dimension_numbers<[1], [0], [0], [1], [0, 0, 1, 1], [], []>} : vector<8x128xf32>, vector<128x64xf32>, vector<8x64xf32> -> vector<8x64xf32>
    %c0_105 = arith.constant 0 : index
    %c0_106 = arith.constant 0 : index
    %277 = vector.load %arg7[%c0_105, %c0_106] : memref<1x64xf32, #tpu.memory_space<vmem>>, vector<1x64xf32>
    %278 = vector.broadcast %277 : vector<1x64xf32> to vector<8x64xf32>
    %279 = arith.addf %276, %278 : vector<8x64xf32>
    %cst_107 = arith.constant 0.000000e+00 : f32
    %280 = vector.broadcast %cst_107 : f32 to vector<8x64xf32>
    %281 = arith.maximumf %279, %280 : vector<8x64xf32>
    %c0_108 = arith.constant 0 : index
    %c0_109 = arith.constant 0 : index
    %282 = vector.load %arg8[%c0_108, %c0_109] : memref<64x48xf32, #tpu.memory_space<vmem>>, vector<64x48xf32>
    %cst_110 = arith.constant dense<0.000000e+00> : vector<8x48xf32>
    %283 = tpu.matmul %281, %282, %cst_110 {dimension_numbers = #tpu.dot_dimension_numbers<[1], [0], [0], [1], [0, 0, 1, 1], [], []>} : vector<8x64xf32>, vector<64x48xf32>, vector<8x48xf32> -> vector<8x48xf32>
    %c0_111 = arith.constant 0 : index
    %c0_112 = arith.constant 0 : index
    %284 = vector.load %arg9[%c0_111, %c0_112] : memref<1x48xf32, #tpu.memory_space<vmem>>, vector<1x48xf32>
    %285 = vector.broadcast %284 : vector<1x48xf32> to vector<8x48xf32>
    %286 = arith.addf %283, %285 : vector<8x48xf32>
    %cst_113 = arith.constant 0.000000e+00 : f32
    %287 = vector.broadcast %cst_113 : f32 to vector<8x48xf32>
    %288 = arith.maximumf %286, %287 : vector<8x48xf32>
    %c0_114 = arith.constant 0 : index
    %c0_115 = arith.constant 0 : index
    %289 = vector.load %arg10[%c0_114, %c0_115] : memref<48x15xf32, #tpu.memory_space<vmem>>, vector<48x15xf32>
    %cst_116 = arith.constant dense<0.000000e+00> : vector<8x15xf32>
    %290 = tpu.matmul %288, %289, %cst_116 {dimension_numbers = #tpu.dot_dimension_numbers<[1], [0], [0], [1], [0, 0, 1, 1], [], []>} : vector<8x48xf32>, vector<48x15xf32>, vector<8x15xf32> -> vector<8x15xf32>
    %c0_117 = arith.constant 0 : index
    %c0_118 = arith.constant 0 : index
    %291 = vector.load %arg11[%c0_117, %c0_118] : memref<1x15xf32, #tpu.memory_space<vmem>>, vector<1x15xf32>
    %292 = vector.broadcast %291 : vector<1x15xf32> to vector<8x15xf32>
    %293 = arith.addf %290, %292 : vector<8x15xf32>
    %cst_119 = arith.constant dense<0xFF800000> : vector<8xf32>
    %294 = vector.multi_reduction <maximumf>, %293, %cst_119 [1] : vector<8x15xf32> to vector<8xf32>
    %295 = vector.shape_cast %294 : vector<8xf32> to vector<8x1xf32>
    %296 = vector.broadcast %295 : vector<8x1xf32> to vector<8x15xf32>
    %297 = arith.subf %293, %296 : vector<8x15xf32>
    %298 = math.exp %297 : vector<8x15xf32>
    %cst_120 = arith.constant dense<0.000000e+00> : vector<8xf32>
    %299 = vector.multi_reduction <add>, %298, %cst_120 [1] : vector<8x15xf32> to vector<8xf32>
    %300 = vector.shape_cast %299 : vector<8xf32> to vector<8x1xf32>
    %301 = vector.broadcast %300 : vector<8x1xf32> to vector<8x15xf32>
    %302 = arith.divf %298, %301 : vector<8x15xf32>
    %cst_121 = arith.constant 0.000000e+00 : f32
    %303 = vector.broadcast %cst_121 : f32 to vector<8x113xf32>
    %304 = tpu.concatenate %302, %303 in 1 : vector<8x15xf32>, vector<8x113xf32> -> vector<8x128xf32>
    %cst_122 = arith.constant 0.000000e+00 : f32
    %305 = vector.broadcast %cst_122 : f32 to vector<8x113xf32>
    %306 = tpu.concatenate %293, %305 in 1 : vector<8x15xf32>, vector<8x113xf32> -> vector<8x128xf32>
    %cst_123 = arith.constant 0.000000e+00 : f32
    %307 = vector.broadcast %cst_123 : f32 to vector<8x80xf32>
    %308 = tpu.concatenate %288, %307 in 1 : vector<8x48xf32>, vector<8x80xf32> -> vector<8x128xf32>
    %309 = tpu.concatenate %304, %306, %308 in 1 : vector<8x128xf32>, vector<8x128xf32>, vector<8x128xf32> -> vector<8x384xf32>
    %c0_124 = arith.constant 0 : index
    %c0_125 = arith.constant 0 : index
    %310 = vector.load %arg12[%c0_124, %c0_125] : memref<8x384xf32, #tpu.memory_space<vmem>>, vector<8x384xf32>
    tpu.vector_store %arg12[%c0_124, %c0_125], %309 {strides = array<i32>} : memref<8x384xf32, #tpu.memory_space<vmem>>, vector<8x384xf32>,
    return
  }
}

</mosaic_0001>

<llo_original>
// kernel: _forward_impl.1
$region0: #{_forward_impl.1}
  #allocation0 [shape = 'u32[]', space=smem, size = 0x4, offset = 0x4, fixed_abs, tag = 'smem constant byte address 0x4 - core index']
  #allocation1 [shape = 'u32[72,128]{1,0:T(1,128)}', space=vmem, size = 0x9000, scoped, tag = 'internal scratch']
  #allocation2 [shape = 'f32[64,128]{1,0:T(8,128)}', space=vmem, size = 0x8000, scoped, tag = 'scratch operand']
  #allocation3 [shape = 'f32[64,384]{1,0:T(8,128)}', space=vmem, size = 0x18000, scoped, tag = 'scratch operand']
  %s0 = inlined_call_operand.vmem [shape: f32[64,32], index: 0, kind: input, shape index: {}]
  %s1 = inlined_call_operand.vmem [shape: f32[32,384], index: 1, kind: input, shape index: {}]
  %s2 = inlined_call_operand.hbm [shape: f32[128,384], index: 2, kind: input, shape index: {}]
  %s3 = inlined_call_operand.vmem [shape: f32[1,384], index: 3, kind: input, shape index: {}]
  %s4 = inlined_call_operand.vmem [shape: f32[1,384], index: 4, kind: input, shape index: {}]
  %s5 = inlined_call_operand.vmem [shape: f32[8,64], index: 5, kind: input, shape index: {}]
  %s6 = inlined_call_operand.vmem [shape: f32[128,64], index: 6, kind: input, shape index: {}]
  %s7 = inlined_call_operand.vmem [shape: f32[1,64], index: 7, kind: input, shape index: {}]
  %s8 = inlined_call_operand.vmem [shape: f32[64,48], index: 8, kind: input, shape index: {}]
  %s9 = inlined_call_operand.vmem [shape: f32[1,48], index: 9, kind: input, shape index: {}]
  %s10 = inlined_call_operand.vmem [shape: f32[48,15], index: 10, kind: input, shape index: {}]
  %s11 = inlined_call_operand.vmem [shape: f32[1,15], index: 11, kind: input, shape index: {}]
  %s12 = inlined_call_operand.vmem [shape: f32[8,384], index: 12, kind: output, shape index: {}]
  %s13 = sld [smem:[#allocation0]]
  $region62: #{_forward_impl.1} parent=0
    _
  %s15 = ssub.s32 1, %s13
  %s16 = scalar_select 0, %s15, %s13
  $region1: #{_forward_impl.1} parent=0
    #allocation4 [shape = 'u8[196608]{0}', space=vmem, size = 0x30000, scoped, tag = 'input window, operand 2, single buffered']
    #allocation5 [shape = 's32[1]{0}', space=sflag, size = 0x4, scoped, tag = 'scoped memory for _forward_impl.1']
    %17 = vsyncpa [#allocation5], 0
    // Predicated region
    $region2: #{_forward_impl.1} parent=1 // pred_check
      _
    $region3: #{_forward_impl.1} parent=1 // pred_check_branch
      %19 = sbr.rel (0) target = $region5
    $region4: #{_forward_impl.1} parent=1 // pred_region
      _
    $region5: #{_forward_impl.1} parent=1 // pred_fallthru
      _
    // Predicated region
    $region6: #{_forward_impl.1} parent=1 // pred_check
      _
    $region7: #{_forward_impl.1} parent=1 // pred_check_branch
      %21 = sbr.rel (0) target = $region9
    $region8: #{_forward_impl.1} parent=1 // pred_region
      _
    $region9: #{_forward_impl.1} parent=1 // pred_fallthru
      _
    // Predicated region
    $region10: #{_forward_impl.1} parent=1 // pred_check
      _
    $region11: #{_forward_impl.1} parent=1 // pred_check_branch
      %23 = sbr.rel (0) target = $region13
    $region12: #{_forward_impl.1} parent=1 // pred_region
      %25 = vsyncadd [#allocation5], 0
      %s26 = sshll.u32 %s2, 4
      %s27 = int_to_ptr.hbm [resolvable:$true] %s26
      %s28 = sshll.u32 [#allocation4], 4
      %s29 = int_to_ptr.vmem [resolvable:$true] %s28
      %34 = dma.hbm_to_vmem [thread:$0]  %s27, 6144, %s29, [#allocation5], 384, 384, 24
    $region13: #{_forward_impl.1} parent=1 // pred_fallthru
      _
    // Predicated region
    $region14: #{_forward_impl.1} parent=1 // pred_check
      _
    $region15: #{_forward_impl.1} parent=1 // pred_check_branch
      %36 = sbr.rel (0) target = $region17
    $region16: #{_forward_impl.1} parent=1 // pred_region
      _
    $region17: #{_forward_impl.1} parent=1 // pred_fallthru
      _
    // Predicated region
    $region18: #{_forward_impl.1} parent=1 // pred_check
      _
    $region19: #{_forward_impl.1} parent=1 // pred_check_branch
      %38 = sbr.rel (0) target = $region21
    $region20: #{_forward_impl.1} parent=1 // pred_region
      _
    $region21: #{_forward_impl.1} parent=1 // pred_fallthru
      _
    // Predicated region
    $region22: #{_forward_impl.1} parent=1 // pred_check
      _
    $region23: #{_forward_impl.1} parent=1 // pred_check_branch
      %40 = sbr.rel (0) target = $region25
    $region24: #{_forward_impl.1} parent=1 // pred_region
      _
    $region25: #{_forward_impl.1} parent=1 // pred_fallthru
      _
    // Predicated region
    $region26: #{_forward_impl.1} parent=1 // pred_check
      _
    $region27: #{_forward_impl.1} parent=1 // pred_check_branch
      %42 = sbr.rel (0) target = $region29
    $region28: #{_forward_impl.1} parent=1 // pred_region
      _
    $region29: #{_forward_impl.1} parent=1 // pred_fallthru
      _
    // Predicated region
    $region30: #{_forward_impl.1} parent=1 // pred_check
      _
    $region31: #{_forward_impl.1} parent=1 // pred_check_branch
      %44 = sbr.rel (0) target = $region33
    $region32: #{_forward_impl.1} parent=1 // pred_region
      _
    $region33: #{_forward_impl.1} parent=1 // pred_fallthru
      _
    // Predicated region
    $region34: #{_forward_impl.1} parent=1 // pred_check
      _
    $region35: #{_forward_impl.1} parent=1 // pred_check_branch
      %46 = sbr.rel (0) target = $region37
    $region36: #{_forward_impl.1} parent=1 // pred_region
      _
    $region37: #{_forward_impl.1} parent=1 // pred_fallthru
      _
    // Predicated region
    $region38: #{_forward_impl.1} parent=1 // pred_check
      _
    $region39: #{_forward_impl.1} parent=1 // pred_check_branch
      %48 = sbr.rel (0) target = $region41
    $region40: #{_forward_impl.1} parent=1 // pred_region
      _
    $region41: #{_forward_impl.1} parent=1 // pred_fallthru
      _
    // Predicated region
    $region42: #{_forward_impl.1} parent=1 // pred_check
      _
    $region43: #{_forward_impl.1} parent=1 // pred_check_branch
      %50 = sbr.rel (0) target = $region45
    $region44: #{_forward_impl.1} parent=1 // pred_region
      _
    $region45: #{_forward_impl.1} parent=1 // pred_fallthru
      _
    // Predicated region
    $region46: #{_forward_impl.1} parent=1 // pred_check
      _
    $region47: #{_forward_impl.1} parent=1 // pred_check_branch
      %52 = sbr.rel (0) target = $region49
    $region48: #{_forward_impl.1} parent=1 // pred_region
      _
    $region49: #{_forward_impl.1} parent=1 // pred_fallthru
      _
    // Predicated region
    $region50: #{_forward_impl.1} parent=1 // pred_check
      _
    $region51: #{_forward_impl.1} parent=1 // pred_check_branch
      %54 = sbr.rel (0) target = $region53
    $region52: #{_forward_impl.1} parent=1 // pred_region
      %56 = dma.done [#allocation5], 6144
    $region53: #{_forward_impl.1} parent=1 // pred_fallthru
      _
    %v57 = vld [vmem:[%s0] sm:$0xff]
    %v58 = vld [vmem:[%s0 + $0x8] sm:$0xff]
    %v59 = vld [vmem:[%s0 + $0x10] sm:$0xff]
    %v60 = vld [vmem:[%s0 + $0x18] sm:$0xff]
    %v61 = vld [vmem:[%s0 + $0x20] sm:$0xff]
    %v62 = vld [vmem:[%s0 + $0x28] sm:$0xff]
    %v63 = vld [vmem:[%s0 + $0x30] sm:$0xff]
    %v64 = vld [vmem:[%s0 + $0x38] sm:$0xff]
    %v65 = vld [vmem:[%s1] sm:$0xff]
    %v66 = vld [vmem:[%s1 + $0x8] sm:$0xff]
    %v67 = vld [vmem:[%s1 + $0x10] sm:$0xff]
    %v68 = vld [vmem:[%s1 + $0x18] sm:$0xff]
    %v69 = vld [vmem:[%s1 + $0x20] sm:$0xff]
    %v70 = vld [vmem:[%s1 + $0x28] sm:$0xff]
    %v71 = vld [vmem:[%s1 + $0x30] sm:$0xff]
    %v72 = vld [vmem:[%s1 + $0x38] sm:$0xff]
    %v73 = vld [vmem:[%s1 + $0x40] sm:$0xff]
    %v74 = vld [vmem:[%s1 + $0x48] sm:$0xff]
    %v75 = vld [vmem:[%s1 + $0x50] sm:$0xff]
    %v76 = vld [vmem:[%s1 + $0x58] sm:$0xff]
    %v77 = vld [vmem:[%s3] sm:$0x7]
    %v79 = vperm.slane %v77, 0
    %v80 = vperm.slane %v77, 1
    %v81 = vperm.slane %v77, 2
    %vm85 = vcmask 261120
    %v87 = vsel %vm85, %v57, 0
    %v90 = vsel %vm85, %v58, 0
    %v93 = vsel %vm85, %v59, 0
    %v96 = vsel %vm85, %v60, 0
    %v99 = vsel %vm85, %v61, 0
    %v102 = vsel %vm85, %v62, 0
    %v105 = vsel %vm85, %v63, 0
    %v108 = vsel %vm85, %v64, 0
    %110 = vmatpush.msra.mxu0 0.0
    %111 = vmatpush.msra.mxu0 0.0
    %112 = vmatpush.msra.mxu0 0.0
    %113 = vmatpush.msra.mxu0 0.0
    %114 = vmatpush.msra.mxu0 0.0
    %115 = vmatpush.msra.mxu0 0.0
    %116 = vmatpush.msra.mxu0 0.0
    %117 = vmatpush.msra.mxu0 0.0
    %118 = vmatpush.msra.mxu0 0.0
    %119 = vmatpush.msra.mxu0 0.0
    %120 = vmatpush.msra.mxu0 0.0
    %121 = vmatpush.msra.mxu0 0.0
    %122 = vmatpush.msra.mxu0 %v74
    %123 = vmatpush.msra.mxu0 %v71
    %124 = vmatpush.msra.mxu0 %v68
    %125 = vmatpush.msra.mxu0 %v65
    %126 = vmatmul.f32.gmra.mxu0 %v87
    %v127 = vpop.f32.mrf.mxu0
    %v128 = vadd.f32 %v79, %v127
    %129 = vmatmul.f32.gmra.mxu0 %v90
    %v130 = vpop.f32.mrf.mxu0
    %v131 = vadd.f32 %v79, %v130
    %132 = vmatmul.f32.gmra.mxu0 %v93
    %v133 = vpop.f32.mrf.mxu0
    %v134 = vadd.f32 %v79, %v133
    %135 = vmatmul.f32.gmra.mxu0 %v96
    %v136 = vpop.f32.mrf.mxu0
    %v137 = vadd.f32 %v79, %v136
    %138 = vmatmul.f32.gmra.mxu0 %v99
    %v139 = vpop.f32.mrf.mxu0
    %v140 = vadd.f32 %v79, %v139
    %141 = vmatmul.f32.gmra.mxu0 %v102
    %v142 = vpop.f32.mrf.mxu0
    %v143 = vadd.f32 %v79, %v142
    %144 = vmatmul.f32.gmra.mxu0 %v105
    %v145 = vpop.f32.mrf.mxu0
    %v146 = vadd.f32 %v79, %v145
    %147 = vmatmul.f32.gmra.mxu0 %v108
    %v148 = vpop.f32.mrf.mxu0
    %v149 = vadd.f32 %v79, %v148
    %150 = vdwg.mxu0
    %151 = vmatpush.msra.mxu0 0.0
    %152 = vmatpush.msra.mxu0 0.0
    %153 = vmatpush.msra.mxu0 0.0
    %154 = vmatpush.msra.mxu0 0.0
    %155 = vmatpush.msra.mxu0 0.0
    %156 = vmatpush.msra.mxu0 0.0
    %157 = vmatpush.msra.mxu0 0.0
    %158 = vmatpush.msra.mxu0 0.0
    %159 = vmatpush.msra.mxu0 0.0
    %160 = vmatpush.msra.mxu0 0.0
    %161 = vmatpush.msra.mxu0 0.0
    %162 = vmatpush.msra.mxu0 0.0
    %163 = vmatpush.msra.mxu0 %v75
    %164 = vmatpush.msra.mxu0 %v72
    %165 = vmatpush.msra.mxu0 %v69
    %166 = vmatpush.msra.mxu0 %v66
    %167 = vmatmul.f32.gmra.mxu0 %v87
    %v168 = vpop.f32.mrf.mxu0
    %v169 = vadd.f32 %v80, %v168
    %170 = vmatmul.f32.gmra.mxu0 %v90
    %v171 = vpop.f32.mrf.mxu0
    %v172 = vadd.f32 %v80, %v171
    %173 = vmatmul.f32.gmra.mxu0 %v93
    %v174 = vpop.f32.mrf.mxu0
    %v175 = vadd.f32 %v80, %v174
    %176 = vmatmul.f32.gmra.mxu0 %v96
    %v177 = vpop.f32.mrf.mxu0
    %v178 = vadd.f32 %v80, %v177
    %179 = vmatmul.f32.gmra.mxu0 %v99
    %v180 = vpop.f32.mrf.mxu0
    %v181 = vadd.f32 %v80, %v180
    %182 = vmatmul.f32.gmra.mxu0 %v102
    %v183 = vpop.f32.mrf.mxu0
    %v184 = vadd.f32 %v80, %v183
    %185 = vmatmul.f32.gmra.mxu0 %v105
    %v186 = vpop.f32.mrf.mxu0
    %v187 = vadd.f32 %v80, %v186
    %188 = vmatmul.f32.gmra.mxu0 %v108
    %v189 = vpop.f32.mrf.mxu0
    %v190 = vadd.f32 %v80, %v189
    %191 = vdwg.mxu0
    %192 = vmatpush.msra.mxu0 0.0
    %193 = vmatpush.msra.mxu0 0.0
    %194 = vmatpush.msra.mxu0 0.0
    %195 = vmatpush.msra.mxu0 0.0
    %196 = vmatpush.msra.mxu0 0.0
    %197 = vmatpush.msra.mxu0 0.0
    %198 = vmatpush.msra.mxu0 0.0
    %199 = vmatpush.msra.mxu0 0.0
    %200 = vmatpush.msra.mxu0 0.0
    %201 = vmatpush.msra.mxu0 0.0
    %202 = vmatpush.msra.mxu0 0.0
    %203 = vmatpush.msra.mxu0 0.0
    %204 = vmatpush.msra.mxu0 %v76
    %205 = vmatpush.msra.mxu0 %v73
    %206 = vmatpush.msra.mxu0 %v70
    %207 = vmatpush.msra.mxu0 %v67
    %208 = vmatmul.f32.gmra.mxu0 %v87
    %v209 = vpop.f32.mrf.mxu0
    %v210 = vadd.f32 %v81, %v209
    %211 = vmatmul.f32.gmra.mxu0 %v90
    %v212 = vpop.f32.mrf.mxu0
    %v213 = vadd.f32 %v81, %v212
    %214 = vmatmul.f32.gmra.mxu0 %v93
    %v215 = vpop.f32.mrf.mxu0
    %v216 = vadd.f32 %v81, %v215
    %217 = vmatmul.f32.gmra.mxu0 %v96
    %v218 = vpop.f32.mrf.mxu0
    %v219 = vadd.f32 %v81, %v218
    %220 = vmatmul.f32.gmra.mxu0 %v99
    %v221 = vpop.f32.mrf.mxu0
    %v222 = vadd.f32 %v81, %v221
    %223 = vmatmul.f32.gmra.mxu0 %v102
    %v224 = vpop.f32.mrf.mxu0
    %v225 = vadd.f32 %v81, %v224
    %226 = vmatmul.f32.gmra.mxu0 %v105
    %v227 = vpop.f32.mrf.mxu0
    %v228 = vadd.f32 %v81, %v227
    %229 = vmatmul.f32.gmra.mxu0 %v108
    %v230 = vpop.f32.mrf.mxu0
    %v231 = vadd.f32 %v81, %v230
    %232 = vdwg.mxu0
    %233 = vst [vmem:[#allocation3] sm:$0xff] %v128
    %234 = vst [vmem:[#allocation3 + $0x8] sm:$0xff] %v169
    %235 = vst [vmem:[#allocation3 + $0x10] sm:$0xff] %v210
    %236 = vst [vmem:[#allocation3 + $0x18] sm:$0xff] %v131
    %237 = vst [vmem:[#allocation3 + $0x20] sm:$0xff] %v172
    %238 = vst [vmem:[#allocation3 + $0x28] sm:$0xff] %v213
    %239 = vst [vmem:[#allocation3 + $0x30] sm:$0xff] %v134
    %240 = vst [vmem:[#allocation3 + $0x38] sm:$0xff] %v175
    %241 = vst [vmem:[#allocation3 + $0x40] sm:$0xff] %v216
    %242 = vst [vmem:[#allocation3 + $0x48] sm:$0xff] %v137
    %243 = vst [vmem:[#allocation3 + $0x50] sm:$0xff] %v178
    %244 = vst [vmem:[#allocation3 + $0x58] sm:$0xff] %v219
    %245 = vst [vmem:[#allocation3 + $0x60] sm:$0xff] %v140
    %246 = vst [vmem:[#allocation3 + $0x68] sm:$0xff] %v181
    %247 = vst [vmem:[#allocation3 + $0x70] sm:$0xff] %v222
    %248 = vst [vmem:[#allocation3 + $0x78] sm:$0xff] %v143
    %249 = vst [vmem:[#allocation3 + $0x80] sm:$0xff] %v184
    %250 = vst [vmem:[#allocation3 + $0x88] sm:$0xff] %v225
    %251 = vst [vmem:[#allocation3 + $0x90] sm:$0xff] %v146
    %252 = vst [vmem:[#allocation3 + $0x98] sm:$0xff] %v187
    %253 = vst [vmem:[#allocation3 + $0xa0] sm:$0xff] %v228
    %254 = vst [vmem:[#allocation3 + $0xa8] sm:$0xff] %v149
    %255 = vst [vmem:[#allocation3 + $0xb0] sm:$0xff] %v190
    %256 = vst [vmem:[#allocation3 + $0xb8] sm:$0xff] %v231
    %v257 = vld [vmem:[#allocation3] sm:$0xff]
    %v258 = vld [vmem:[#allocation3 + $0x8] sm:$0xff]
    %v259 = vld [vmem:[#allocation3 + $0x10] sm:$0xff]
    %v260 = vld [vmem:[#allocation4] sm:$0xff]
    %v261 = vld [vmem:[#allocation4 + $0x8] sm:$0xff]
    %v262 = vld [vmem:[#allocation4 + $0x10] sm:$0xff]
    %v263 = vld [vmem:[#allocation4 + $0x18] sm:$0xff]
    %v264 = vld [vmem:[#allocation4 + $0x20] sm:$0xff]
    %v265 = vld [vmem:[#allocation4 + $0x28] sm:$0xff]
    %v266 = vld [vmem:[#allocation4 + $0x30] sm:$0xff]
    %v267 = vld [vmem:[#allocation4 + $0x38] sm:$0xff]
    %v268 = vld [vmem:[#allocation4 + $0x40] sm:$0xff]
    %v269 = vld [vmem:[#allocation4 + $0x48] sm:$0xff]
    %v270 = vld [vmem:[#allocation4 + $0x50] sm:$0xff]
    %v271 = vld [vmem:[#allocation4 + $0x58] sm:$0xff]
    %v272 = vld [vmem:[#allocation4 + $0x60] sm:$0xff]
    %v273 = vld [vmem:[#allocation4 + $0x68] sm:$0xff]
    %v274 = vld [vmem:[#allocation4 + $0x70] sm:$0xff]
    %v275 = vld [vmem:[#allocation4 + $0x78] sm:$0xff]
    %v276 = vld [vmem:[#allocation4 + $0x80] sm:$0xff]
    %v277 = vld [vmem:[#allocation4 + $0x88] sm:$0xff]
    %v278 = vld [vmem:[#allocation4 + $0x90] sm:$0xff]
    %v279 = vld [vmem:[#allocation4 + $0x98] sm:$0xff]
    %v280 = vld [vmem:[#allocation4 + $0xa0] sm:$0xff]
    %v281 = vld [vmem:[#allocation4 + $0xa8] sm:$0xff]
    %v282 = vld [vmem:[#allocation4 + $0xb0] sm:$0xff]
    %v283 = vld [vmem:[#allocation4 + $0xb8] sm:$0xff]
    %v284 = vld [vmem:[#allocation4 + $0xc0] sm:$0xff]
    %v285 = vld [vmem:[#allocation4 + $0xc8] sm:$0xff]
    %v286 = vld [vmem:[#allocation4 + $0xd0] sm:$0xff]
    %v287 = vld [vmem:[#allocation4 + $0xd8] sm:$0xff]
    %v288 = vld [vmem:[#allocation4 + $0xe0] sm:$0xff]
    %v289 = vld [vmem:[#allocation4 + $0xe8] sm:$0xff]
    %v290 = vld [vmem:[#allocation4 + $0xf0] sm:$0xff]
    %v291 = vld [vmem:[#allocation4 + $0xf8] sm:$0xff]
    %v292 = vld [vmem:[#allocation4 + $0x100] sm:$0xff]
    %v293 = vld [vmem:[#allocation4 + $0x108] sm:$0xff]
    %v294 = vld [vmem:[#allocation4 + $0x110] sm:$0xff]
    %v295 = vld [vmem:[#allocation4 + $0x118] sm:$0xff]
    %v296 = vld [vmem:[#allocation4 + $0x120] sm:$0xff]
    %v297 = vld [vmem:[#allocation4 + $0x128] sm:$0xff]
    %v298 = vld [vmem:[#allocation4 + $0x130] sm:$0xff]
    %v299 = vld [vmem:[#allocation4 + $0x138] sm:$0xff]
    %v300 = vld [vmem:[#allocation4 + $0x140] sm:$0xff]
    %v301 = vld [vmem:[#allocation4 + $0x148] sm:$0xff]
    %v302 = vld [vmem:[#allocation4 + $0x150] sm:$0xff]
    %v303 = vld [vmem:[#allocation4 + $0x158] sm:$0xff]
    %v304 = vld [vmem:[#allocation4 + $0x160] sm:$0xff]
    %v305 = vld [vmem:[#allocation4 + $0x168] sm:$0xff]
    %v306 = vld [vmem:[#allocation4 + $0x170] sm:$0xff]
    %v307 = vld [vmem:[#allocation4 + $0x178] sm:$0xff]
    %v308 = vld [vmem:[%s4] sm:$0x7]
    %v310 = vperm.slane %v308, 0
    %v311 = vperm.slane %v308, 1
    %v312 = vperm.slane %v308, 2
    %316 = vmatpush.msra.mxu0 %v305
    %317 = vmatpush.msra.mxu0 %v302
    %318 = vmatpush.msra.mxu0 %v299
    %319 = vmatpush.msra.mxu0 %v296
    %320 = vmatpush.msra.mxu0 %v293
    %321 = vmatpush.msra.mxu0 %v290
    %322 = vmatpush.msra.mxu0 %v287
    %323 = vmatpush.msra.mxu0 %v284
    %324 = vmatpush.msra.mxu0 %v281
    %325 = vmatpush.msra.mxu0 %v278
    %326 = vmatpush.msra.mxu0 %v275
    %327 = vmatpush.msra.mxu0 %v272
    %328 = vmatpush.msra.mxu0 %v269
    %329 = vmatpush.msra.mxu0 %v266
    %330 = vmatpush.msra.mxu0 %v263
    %331 = vmatpush.msra.mxu0 %v260
    %332 = vmatmul.f32.gmra.mxu0 0.0
    %v333 = vpop.f32.mrf.mxu0
    %v334 = vadd.f32 %v310, %v333
    %335 = vdwg.mxu0
    %336 = vmatpush.msra.mxu0 %v306
    %337 = vmatpush.msra.mxu0 %v303
    %338 = vmatpush.msra.mxu0 %v300
    %339 = vmatpush.msra.mxu0 %v297
    %340 = vmatpush.msra.mxu0 %v294
    %341 = vmatpush.msra.mxu0 %v291
    %342 = vmatpush.msra.mxu0 %v288
    %343 = vmatpush.msra.mxu0 %v285
    %344 = vmatpush.msra.mxu0 %v282
    %345 = vmatpush.msra.mxu0 %v279
    %346 = vmatpush.msra.mxu0 %v276
    %347 = vmatpush.msra.mxu0 %v273
    %348 = vmatpush.msra.mxu0 %v270
    %349 = vmatpush.msra.mxu0 %v267
    %350 = vmatpush.msra.mxu0 %v264
    %351 = vmatpush.msra.mxu0 %v261
    %352 = vmatmul.f32.gmra.mxu0 0.0
    %v353 = vpop.f32.mrf.mxu0
    %v354 = vadd.f32 %v311, %v353
    %355 = vdwg.mxu0
    %356 = vmatpush.msra.mxu0 %v307
    %357 = vmatpush.msra.mxu0 %v304
    %358 = vmatpush.msra.mxu0 %v301
    %359 = vmatpush.msra.mxu0 %v298
    %360 = vmatpush.msra.mxu0 %v295
    %361 = vmatpush.msra.mxu0 %v292
    %362 = vmatpush.msra.mxu0 %v289
    %363 = vmatpush.msra.mxu0 %v286
    %364 = vmatpush.msra.mxu0 %v283
    %365 = vmatpush.msra.mxu0 %v280
    %366 = vmatpush.msra.mxu0 %v277
    %367 = vmatpush.msra.mxu0 %v274
    %368 = vmatpush.msra.mxu0 %v271
    %369 = vmatpush.msra.mxu0 %v268
    %370 = vmatpush.msra.mxu0 %v265
    %371 = vmatpush.msra.mxu0 %v262
    %372 = vmatmul.f32.gmra.mxu0 0.0
    %v373 = vpop.f32.mrf.mxu0
    %v374 = vadd.f32 %v312, %v373
    %375 = vdwg.mxu0
    %v376 = vadd.f32 %v257, %v334
    %v377 = vxor.u32 %v376, 2147483648
    %v378 = vmul.f32 %v377, 1.442695
    %v379 = vpow.pop %v378
    %v380 = vadd.f32 %v379, 1.0
    %v381 = vrcp.pop %v380
    %v382 = vmul.f32 %v380, %v381
    %v383 = vsub.f32 1.0, %v382
    %v384 = vmul.f32 %v381, %v383
    %v385 = vadd.f32 %v381, %v384
    %vm386 = vweird.f32 %v380
    %vm387 = vweird.f32 %v381
    %vm388 = vmor %vm386, %vm387
    %v389 = vsel %vm388, %v381, %v385
    %v390 = vand.u32 2147483647, %v380
    %vm391 = vcmp.eq.f32.partialorder %v390, 8.507059e+37
    %v392 = vand.u32 %v380, 2147483648
    %v393 = vor.u32 1.1754944e-38, %v392
    %v394 = vsel %vm391, %v393, %v389
    %v395 = vmul.f32 1.0, %v394
    %v396 = vadd.f32 %v258, %v354
    %v397 = vxor.u32 %v396, 2147483648
    %v398 = vmul.f32 %v397, 1.442695
    %v399 = vpow.pop %v398
    %v400 = vadd.f32 %v399, 1.0
    %v401 = vrcp.pop %v400
    %v402 = vmul.f32 %v400, %v401
    %v403 = vsub.f32 1.0, %v402
    %v404 = vmul.f32 %v401, %v403
    %v405 = vadd.f32 %v401, %v404
    %vm406 = vweird.f32 %v400
    %vm407 = vweird.f32 %v401
    %vm408 = vmor %vm406, %vm407
    %v409 = vsel %vm408, %v401, %v405
    %v410 = vand.u32 2147483647, %v400
    %vm411 = vcmp.eq.f32.partialorder %v410, 8.507059e+37
    %v412 = vand.u32 %v400, 2147483648
    %v413 = vor.u32 1.1754944e-38, %v412
    %v414 = vsel %vm411, %v413, %v409
    %v415 = vmul.f32 1.0, %v414
    %v416 = vmul.f32 %v395, %v374
    %v417 = vadd.f32 %v259, %v416
    %v418 = vtanh.pop %v417
    %v419 = vsub.f32 1.0, %v415
    %v420 = vmul.f32 %v419, %v418
    %v421 = vmul.f32 %v415, 0.0
    %v422 = vadd.f32 %v420, %v421
    %423 = vst [vmem:[#allocation2] sm:$0xff] %v422
    %v424 = vld [vmem:[#allocation3 + $0x18] sm:$0xff]
    %v425 = vld [vmem:[#allocation3 + $0x20] sm:$0xff]
    %v426 = vld [vmem:[#allocation3 + $0x28] sm:$0xff]
    %v427 = vld [vmem:[#allocation4] sm:$0xff]
    %v428 = vld [vmem:[#allocation4 + $0x8] sm:$0xff]
    %v429 = vld [vmem:[#allocation4 + $0x10] sm:$0xff]
    %v430 = vld [vmem:[#allocation4 + $0x18] sm:$0xff]
    %v431 = vld [vmem:[#allocation4 + $0x20] sm:$0xff]
    %v432 = vld [vmem:[#allocation4 + $0x28] sm:$0xff]
    %v433 = vld [vmem:[#allocation4 + $0x30] sm:$0xff]
    %v434 = vld [vmem:[#allocation4 + $0x38] sm:$0xff]
    %v435 = vld [vmem:[#allocation4 + $0x40] sm:$0xff]
    %v436 = vld [vmem:[#allocation4 + $0x48] sm:$0xff]
    %v437 = vld [vmem:[#allocation4 + $0x50] sm:$0xff]
    %v438 = vld [vmem:[#allocation4 + $0x58] sm:$0xff]
    %v439 = vld [vmem:[#allocation4 + $0x60] sm:$0xff]
    %v440 = vld [vmem:[#allocation4 + $0x68] sm:$0xff]
    %v441 = vld [vmem:[#allocation4 + $0x70] sm:$0xff]
    %v442 = vld [vmem:[#allocation4 + $0x78] sm:$0xff]
    %v443 = vld [vmem:[#allocation4 + $0x80] sm:$0xff]
    %v444 = vld [vmem:[#allocation4 + $0x88] sm:$0xff]
    %v445 = vld [vmem:[#allocation4 + $0x90] sm:$0xff]
    %v446 = vld [vmem:[#allocation4 + $0x98] sm:$0xff]
    %v447 = vld [vmem:[#allocation4 + $0xa0] sm:$0xff]
    %v448 = vld [vmem:[#allocation4 + $0xa8] sm:$0xff]
    %v449 = vld [vmem:[#allocation4 + $0xb0] sm:$0xff]
    %v450 = vld [vmem:[#allocation4 + $0xb8] sm:$0xff]
    %v451 = vld [vmem:[#allocation4 + $0xc0] sm:$0xff]
    %v452 = vld [vmem:[#allocation4 + $0xc8] sm:$0xff]
    %v453 = vld [vmem:[#allocation4 + $0xd0] sm:$0xff]
    %v454 = vld [vmem:[#allocation4 + $0xd8] sm:$0xff]
    %v455 = vld [vmem:[#allocation4 + $0xe0] sm:$0xff]
    %v456 = vld [vmem:[#allocation4 + $0xe8] sm:$0xff]
    %v457 = vld [vmem:[#allocation4 + $0xf0] sm:$0xff]
    %v458 = vld [vmem:[#allocation4 + $0xf8] sm:$0xff]
    %v459 = vld [vmem:[#allocation4 + $0x100] sm:$0xff]
    %v460 = vld [vmem:[#allocation4 + $0x108] sm:$0xff]
    %v461 = vld [vmem:[#allocation4 + $0x110] sm:$0xff]
    %v462 = vld [vmem:[#allocation4 + $0x118] sm:$0xff]
    %v463 = vld [vmem:[#allocation4 + $0x120] sm:$0xff]
    %v464 = vld [vmem:[#allocation4 + $0x128] sm:$0xff]
    %v465 = vld [vmem:[#allocation4 + $0x130] sm:$0xff]
    %v466 = vld [vmem:[#allocation4 + $0x138] sm:$0xff]
    %v467 = vld [vmem:[#allocation4 + $0x140] sm:$0xff]
    %v468 = vld [vmem:[#allocation4 + $0x148] sm:$0xff]
    %v469 = vld [vmem:[#allocation4 + $0x150] sm:$0xff]
    %v470 = vld [vmem:[#allocation4 + $0x158] sm:$0xff]
    %v471 = vld [vmem:[#allocation4 + $0x160] sm:$0xff]
    %v472 = vld [vmem:[#allocation4 + $0x168] sm:$0xff]
    %v473 = vld [vmem:[#allocation4 + $0x170] sm:$0xff]
    %v474 = vld [vmem:[#allocation4 + $0x178] sm:$0xff]
    %v475 = vld [vmem:[%s4] sm:$0x7]
    %v477 = vperm.slane %v475, 0
    %v478 = vperm.slane %v475, 1
    %v479 = vperm.slane %v475, 2
    %483 = vmatpush.msra.mxu0 %v472
    %484 = vmatpush.msra.mxu0 %v469
    %485 = vmatpush.msra.mxu0 %v466
    %486 = vmatpush.msra.mxu0 %v463
    %487 = vmatpush.msra.mxu0 %v460
    %488 = vmatpush.msra.mxu0 %v457
    %489 = vmatpush.msra.mxu0 %v454
    %490 = vmatpush.msra.mxu0 %v451
    %491 = vmatpush.msra.mxu0 %v448
    %492 = vmatpush.msra.mxu0 %v445
    %493 = vmatpush.msra.mxu0 %v442
    %494 = vmatpush.msra.mxu0 %v439
    %495 = vmatpush.msra.mxu0 %v436
    %496 = vmatpush.msra.mxu0 %v433
    %497 = vmatpush.msra.mxu0 %v430
    %498 = vmatpush.msra.mxu0 %v427
    %499 = vmatmul.f32.gmra.mxu0 %v422
    %v500 = vpop.f32.mrf.mxu0
    %v501 = vadd.f32 %v477, %v500
    %502 = vdwg.mxu0
    %503 = vmatpush.msra.mxu0 %v473
    %504 = vmatpush.msra.mxu0 %v470
    %505 = vmatpush.msra.mxu0 %v467
    %506 = vmatpush.msra.mxu0 %v464
    %507 = vmatpush.msra.mxu0 %v461
    %508 = vmatpush.msra.mxu0 %v458
    %509 = vmatpush.msra.mxu0 %v455
    %510 = vmatpush.msra.mxu0 %v452
    %511 = vmatpush.msra.mxu0 %v449
    %512 = vmatpush.msra.mxu0 %v446
    %513 = vmatpush.msra.mxu0 %v443
    %514 = vmatpush.msra.mxu0 %v440
    %515 = vmatpush.msra.mxu0 %v437
    %516 = vmatpush.msra.mxu0 %v434
    %517 = vmatpush.msra.mxu0 %v431
    %518 = vmatpush.msra.mxu0 %v428
    %519 = vmatmul.f32.gmra.mxu0 %v422
    %v520 = vpop.f32.mrf.mxu0
    %v521 = vadd.f32 %v478, %v520
    %522 = vdwg.mxu0
    %523 = vmatpush.msra.mxu0 %v474
    %524 = vmatpush.msra.mxu0 %v471
    %525 = vmatpush.msra.mxu0 %v468
    %526 = vmatpush.msra.mxu0 %v465
    %527 = vmatpush.msra.mxu0 %v462
    %528 = vmatpush.msra.mxu0 %v459
    %529 = vmatpush.msra.mxu0 %v456
    %530 = vmatpush.msra.mxu0 %v453
    %531 = vmatpush.msra.mxu0 %v450
    %532 = vmatpush.msra.mxu0 %v447
    %533 = vmatpush.msra.mxu0 %v444
    %534 = vmatpush.msra.mxu0 %v441
    %535 = vmatpush.msra.mxu0 %v438
    %536 = vmatpush.msra.mxu0 %v435
    %537 = vmatpush.msra.mxu0 %v432
    %538 = vmatpush.msra.mxu0 %v429
    %539 = vmatmul.f32.gmra.mxu0 %v422
    %v540 = vpop.f32.mrf.mxu0
    %v541 = vadd.f32 %v479, %v540
    %542 = vdwg.mxu0
    %v543 = vadd.f32 %v424, %v501
    %v544 = vxor.u32 %v543, 2147483648
    %v545 = vmul.f32 %v544, 1.442695
    %v546 = vpow.pop %v545
    %v547 = vadd.f32 %v546, 1.0
    %v548 = vrcp.pop %v547
    %v549 = vmul.f32 %v547, %v548
    %v550 = vsub.f32 1.0, %v549
    %v551 = vmul.f32 %v548, %v550
    %v552 = vadd.f32 %v548, %v551
    %vm553 = vweird.f32 %v547
    %vm554 = vweird.f32 %v548
    %vm555 = vmor %vm553, %vm554
    %v556 = vsel %vm555, %v548, %v552
    %v557 = vand.u32 2147483647, %v547
    %vm558 = vcmp.eq.f32.partialorder %v557, 8.507059e+37
    %v559 = vand.u32 %v547, 2147483648
    %v560 = vor.u32 1.1754944e-38, %v559
    %v561 = vsel %vm558, %v560, %v556
    %v562 = vmul.f32 1.0, %v561
    %v563 = vadd.f32 %v425, %v521
    %v564 = vxor.u32 %v563, 2147483648
    %v565 = vmul.f32 %v564, 1.442695
    %v566 = vpow.pop %v565
    %v567 = vadd.f32 %v566, 1.0
    %v568 = vrcp.pop %v567
    %v569 = vmul.f32 %v567, %v568
    %v570 = vsub.f32 1.0, %v569
    %v571 = vmul.f32 %v568, %v570
    %v572 = vadd.f32 %v568, %v571
    %vm573 = vweird.f32 %v567
    %vm574 = vweird.f32 %v568
    %vm575 = vmor %vm573, %vm574
    %v576 = vsel %vm575, %v568, %v572
    %v577 = vand.u32 2147483647, %v567
    %vm578 = vcmp.eq.f32.partialorder %v577, 8.507059e+37
    %v579 = vand.u32 %v567, 2147483648
    %v580 = vor.u32 1.1754944e-38, %v579
    %v581 = vsel %vm578, %v580, %v576
    %v582 = vmul.f32 1.0, %v581
    %v583 = vmul.f32 %v562, %v541
    %v584 = vadd.f32 %v426, %v583
    %v585 = vtanh.pop %v584
    %v586 = vsub.f32 1.0, %v582
    %v587 = vmul.f32 %v586, %v585
    %v588 = vmul.f32 %v582, %v422
    %v589 = vadd.f32 %v587, %v588
    %590 = vst [vmem:[#allocation2 + $0x8] sm:$0xff] %v589
    %v591 = vld [vmem:[#allocation3 + $0x30] sm:$0xff]
    %v592 = vld [vmem:[#allocation3 + $0x38] sm:$0xff]
    %v593 = vld [vmem:[#allocation3 + $0x40] sm:$0xff]
    %v594 = vld [vmem:[#allocation4] sm:$0xff]
    %v595 = vld [vmem:[#allocation4 + $0x8] sm:$0xff]
    %v596 = vld [vmem:[#allocation4 + $0x10] sm:$0xff]
    %v597 = vld [vmem:[#allocation4 + $0x18] sm:$0xff]
    %v598 = vld [vmem:[#allocation4 + $0x20] sm:$0xff]
    %v599 = vld [vmem:[#allocation4 + $0x28] sm:$0xff]
    %v600 = vld [vmem:[#allocation4 + $0x30] sm:$0xff]
    %v601 = vld [vmem:[#allocation4 + $0x38] sm:$0xff]
    %v602 = vld [vmem:[#allocation4 + $0x40] sm:$0xff]
    %v603 = vld [vmem:[#allocation4 + $0x48] sm:$0xff]
    %v604 = vld [vmem:[#allocation4 + $0x50] sm:$0xff]
    %v605 = vld [vmem:[#allocation4 + $0x58] sm:$0xff]
    %v606 = vld [vmem:[#allocation4 + $0x60] sm:$0xff]
    %v607 = vld [vmem:[#allocation4 + $0x68] sm:$0xff]
    %v608 = vld [vmem:[#allocation4 + $0x70] sm:$0xff]
    %v609 = vld [vmem:[#allocation4 + $0x78] sm:$0xff]
    %v610 = vld [vmem:[#allocation4 + $0x80] sm:$0xff]
    %v611 = vld [vmem:[#allocation4 + $0x88] sm:$0xff]
    %v612 = vld [vmem:[#allocation4 + $0x90] sm:$0xff]
    %v613 = vld [vmem:[#allocation4 + $0x98] sm:$0xff]
    %v614 = vld [vmem:[#allocation4 + $0xa0] sm:$0xff]
    %v615 = vld [vmem:[#allocation4 + $0xa8] sm:$0xff]
    %v616 = vld [vmem:[#allocation4 + $0xb0] sm:$0xff]
    %v617 = vld [vmem:[#allocation4 + $0xb8] sm:$0xff]
    %v618 = vld [vmem:[#allocation4 + $0xc0] sm:$0xff]
    %v619 = vld [vmem:[#allocation4 + $0xc8] sm:$0xff]
    %v620 = vld [vmem:[#allocation4 + $0xd0] sm:$0xff]
    %v621 = vld [vmem:[#allocation4 + $0xd8] sm:$0xff]
    %v622 = vld [vmem:[#allocation4 + $0xe0] sm:$0xff]
    %v623 = vld [vmem:[#allocation4 + $0xe8] sm:$0xff]
    %v624 = vld [vmem:[#allocation4 + $0xf0] sm:$0xff]
    %v625 = vld [vmem:[#allocation4 + $0xf8] sm:$0xff]
    %v626 = vld [vmem:[#allocation4 + $0x100] sm:$0xff]
    %v627 = vld [vmem:[#allocation4 + $0x108] sm:$0xff]
    %v628 = vld [vmem:[#allocation4 + $0x110] sm:$0xff]
    %v629 = vld [vmem:[#allocation4 + $0x118] sm:$0xff]
    %v630 = vld [vmem:[#allocation4 + $0x120] sm:$0xff]
    %v631 = vld [vmem:[#allocation4 + $0x128] sm:$0xff]
    %v632 = vld [vmem:[#allocation4 + $0x130] sm:$0xff]
    %v633 = vld [vmem:[#allocation4 + $0x138] sm:$0xff]
    %v634 = vld [vmem:[#allocation4 + $0x140] sm:$0xff]
    %v635 = vld [vmem:[#allocation4 + $0x148] sm:$0xff]
    %v636 = vld [vmem:[#allocation4 + $0x150] sm:$0xff]
    %v637 = vld [vmem:[#allocation4 + $0x158] sm:$0xff]
    %v638 = vld [vmem:[#allocation4 + $0x160] sm:$0xff]
    %v639 = vld [vmem:[#allocation4 + $0x168] sm:$0xff]
    %v640 = vld [vmem:[#allocation4 + $0x170] sm:$0xff]
    %v641 = vld [vmem:[#allocation4 + $0x178] sm:$0xff]
    %v642 = vld [vmem:[%s4] sm:$0x7]
    %v644 = vperm.slane %v642, 0
    %v645 = vperm.slane %v642, 1
    %v646 = vperm.slane %v642, 2
    %650 = vmatpush.msra.mxu0 %v639
    %651 = vmatpush.msra.mxu0 %v636
    %652 = vmatpush.msra.mxu0 %v633
    %653 = vmatpush.msra.mxu0 %v630
    %654 = vmatpush.msra.mxu0 %v627
    %655 = vmatpush.msra.mxu0 %v624
    %656 = vmatpush.msra.mxu0 %v621
    %657 = vmatpush.msra.mxu0 %v618
    %658 = vmatpush.msra.mxu0 %v615
    %659 = vmatpush.msra.mxu0 %v612
    %660 = vmatpush.msra.mxu0 %v609
    %661 = vmatpush.msra.mxu0 %v606
    %662 = vmatpush.msra.mxu0 %v603
    %663 = vmatpush.msra.mxu0 %v600
    %664 = vmatpush.msra.mxu0 %v597
    %665 = vmatpush.msra.mxu0 %v594
    %666 = vmatmul.f32.gmra.mxu0 %v589
    %v667 = vpop.f32.mrf.mxu0
    %v668 = vadd.f32 %v644, %v667
    %669 = vdwg.mxu0
    %670 = vmatpush.msra.mxu0 %v640
    %671 = vmatpush.msra.mxu0 %v637
    %672 = vmatpush.msra.mxu0 %v634
    %673 = vmatpush.msra.mxu0 %v631
    %674 = vmatpush.msra.mxu0 %v628
    %675 = vmatpush.msra.mxu0 %v625
    %676 = vmatpush.msra.mxu0 %v622
    %677 = vmatpush.msra.mxu0 %v619
    %678 = vmatpush.msra.mxu0 %v616
    %679 = vmatpush.msra.mxu0 %v613
    %680 = vmatpush.msra.mxu0 %v610
    %681 = vmatpush.msra.mxu0 %v607
    %682 = vmatpush.msra.mxu0 %v604
    %683 = vmatpush.msra.mxu0 %v601
    %684 = vmatpush.msra.mxu0 %v598
    %685 = vmatpush.msra.mxu0 %v595
    %686 = vmatmul.f32.gmra.mxu0 %v589
    %v687 = vpop.f32.mrf.mxu0
    %v688 = vadd.f32 %v645, %v687
    %689 = vdwg.mxu0
    %690 = vmatpush.msra.mxu0 %v641
    %691 = vmatpush.msra.mxu0 %v638
    %692 = vmatpush.msra.mxu0 %v635
    %693 = vmatpush.msra.mxu0 %v632
    %694 = vmatpush.msra.mxu0 %v629
    %695 = vmatpush.msra.mxu0 %v626
    %696 = vmatpush.msra.mxu0 %v623
    %697 = vmatpush.msra.mxu0 %v620
    %698 = vmatpush.msra.mxu0 %v617
    %699 = vmatpush.msra.mxu0 %v614
    %700 = vmatpush.msra.mxu0 %v611
    %701 = vmatpush.msra.mxu0 %v608
    %702 = vmatpush.msra.mxu0 %v605
    %703 = vmatpush.msra.mxu0 %v602
    %704 = vmatpush.msra.mxu0 %v599
    %705 = vmatpush.msra.mxu0 %v596
    %706 = vmatmul.f32.gmra.mxu0 %v589
    %v707 = vpop.f32.mrf.mxu0
    %v708 = vadd.f32 %v646, %v707
    %709 = vdwg.mxu0
    %v710 = vadd.f32 %v591, %v668
    %v711 = vxor.u32 %v710, 2147483648
    %v712 = vmul.f32 %v711, 1.442695
    %v713 = vpow.pop %v712
    %v714 = vadd.f32 %v713, 1.0
    %v715 = vrcp.pop %v714
    %v716 = vmul.f32 %v714, %v715
    %v717 = vsub.f32 1.0, %v716
    %v718 = vmul.f32 %v715, %v717
    %v719 = vadd.f32 %v715, %v718
    %vm720 = vweird.f32 %v714
    %vm721 = vweird.f32 %v715
    %vm722 = vmor %vm720, %vm721
    %v723 = vsel %vm722, %v715, %v719
    %v724 = vand.u32 2147483647, %v714
    %vm725 = vcmp.eq.f32.partialorder %v724, 8.507059e+37
    %v726 = vand.u32 %v714, 2147483648
    %v727 = vor.u32 1.1754944e-38, %v726
    %v728 = vsel %vm725, %v727, %v723
    %v729 = vmul.f32 1.0, %v728
    %v730 = vadd.f32 %v592, %v688
    %v731 = vxor.u32 %v730, 2147483648
    %v732 = vmul.f32 %v731, 1.442695
    %v733 = vpow.pop %v732
    %v734 = vadd.f32 %v733, 1.0
    %v735 = vrcp.pop %v734
    %v736 = vmul.f32 %v734, %v735
    %v737 = vsub.f32 1.0, %v736
    %v738 = vmul.f32 %v735, %v737
    %v739 = vadd.f32 %v735, %v738
    %vm740 = vweird.f32 %v734
    %vm741 = vweird.f32 %v735
    %vm742 = vmor %vm740, %vm741
    %v743 = vsel %vm742, %v735, %v739
    %v744 = vand.u32 2147483647, %v734
    %vm745 = vcmp.eq.f32.partialorder %v744, 8.507059e+37
    %v746 = vand.u32 %v734, 2147483648
    %v747 = vor.u32 1.1754944e-38, %v746
    %v748 = vsel %vm745, %v747, %v743
    %v749 = vmul.f32 1.0, %v748
    %v750 = vmul.f32 %v729, %v708
    %v751 = vadd.f32 %v593, %v750
    %v752 = vtanh.pop %v751
    %v753 = vsub.f32 1.0, %v749
    %v754 = vmul.f32 %v753, %v752
    %v755 = vmul.f32 %v749, %v589
    %v756 = vadd.f32 %v754, %v755
    %757 = vst [vmem:[#allocation2 + $0x10] sm:$0xff] %v756
    %v758 = vld [vmem:[#allocation3 + $0x48] sm:$0xff]
    %v759 = vld [vmem:[#allocation3 + $0x50] sm:$0xff]
    %v760 = vld [vmem:[#allocation3 + $0x58] sm:$0xff]
    %v761 = vld [vmem:[#allocation4] sm:$0xff]
    %v762 = vld [vmem:[#allocation4 + $0x8] sm:$0xff]
    %v763 = vld [vmem:[#allocation4 + $0x10] sm:$0xff]
    %v764 = vld [vmem:[#allocation4 + $0x18] sm:$0xff]
    %v765 = vld [vmem:[#allocation4 + $0x20] sm:$0xff]
    %v766 = vld [vmem:[#allocation4 + $0x28] sm:$0xff]
    %v767 = vld [vmem:[#allocation4 + $0x30] sm:$0xff]
    %v768 = vld [vmem:[#allocation4 + $0x38] sm:$0xff]
    %v769 = vld [vmem:[#allocation4 + $0x40] sm:$0xff]
    %v770 = vld [vmem:[#allocation4 + $0x48] sm:$0xff]
    %v771 = vld [vmem:[#allocation4 + $0x50] sm:$0xff]
    %v772 = vld [vmem:[#allocation4 + $0x58] sm:$0xff]
    %v773 = vld [vmem:[#allocation4 + $0x60] sm:$0xff]
    %v774 = vld [vmem:[#allocation4 + $0x68] sm:$0xff]
    %v775 = vld [vmem:[#allocation4 + $0x70] sm:$0xff]
    %v776 = vld [vmem:[#allocation4 + $0x78] sm:$0xff]
    %v777 = vld [vmem:[#allocation4 + $0x80] sm:$0xff]
    %v778 = vld [vmem:[#allocation4 + $0x88] sm:$0xff]
    %v779 = vld [vmem:[#allocation4 + $0x90] sm:$0xff]
    %v780 = vld [vmem:[#allocation4 + $0x98] sm:$0xff]
    %v781 = vld [vmem:[#allocation4 + $0xa0] sm:$0xff]
    %v782 = vld [vmem:[#allocation4 + $0xa8] sm:$0xff]
    %v783 = vld [vmem:[#allocation4 + $0xb0] sm:$0xff]
    %v784 = vld [vmem:[#allocation4 + $0xb8] sm:$0xff]
    %v785 = vld [vmem:[#allocation4 + $0xc0] sm:$0xff]
    %v786 = vld [vmem:[#allocation4 + $0xc8] sm:$0xff]
    %v787 = vld [vmem:[#allocation4 + $0xd0] sm:$0xff]
    %v788 = vld [vmem:[#allocation4 + $0xd8] sm:$0xff]
    %v789 = vld [vmem:[#allocation4 + $0xe0] sm:$0xff]
    %v790 = vld [vmem:[#allocation4 + $0xe8] sm:$0xff]
    %v791 = vld [vmem:[#allocation4 + $0xf0] sm:$0xff]
    %v792 = vld [vmem:[#allocation4 + $0xf8] sm:$0xff]
    %v793 = vld [vmem:[#allocation4 + $0x100] sm:$0xff]
    %v794 = vld [vmem:[#allocation4 + $0x108] sm:$0xff]
    %v795 = vld [vmem:[#allocation4 + $0x110] sm:$0xff]
    %v796 = vld [vmem:[#allocation4 + $0x118] sm:$0xff]
    %v797 = vld [vmem:[#allocation4 + $0x120] sm:$0xff]
    %v798 = vld [vmem:[#allocation4 + $0x128] sm:$0xff]
    %v799 = vld [vmem:[#allocation4 + $0x130] sm:$0xff]
    %v800 = vld [vmem:[#allocation4 + $0x138] sm:$0xff]
    %v801 = vld [vmem:[#allocation4 + $0x140] sm:$0xff]
    %v802 = vld [vmem:[#allocation4 + $0x148] sm:$0xff]
    %v803 = vld [vmem:[#allocation4 + $0x150] sm:$0xff]
    %v804 = vld [vmem:[#allocation4 + $0x158] sm:$0xff]
    %v805 = vld [vmem:[#allocation4 + $0x160] sm:$0xff]
    %v806 = vld [vmem:[#allocation4 + $0x168] sm:$0xff]
    %v807 = vld [vmem:[#allocation4 + $0x170] sm:$0xff]
    %v808 = vld [vmem:[#allocation4 + $0x178] sm:$0xff]
    %v809 = vld [vmem:[%s4] sm:$0x7]
    %v811 = vperm.slane %v809, 0
    %v812 = vperm.slane %v809, 1
    %v813 = vperm.slane %v809, 2
    %817 = vmatpush.msra.mxu0 %v806
    %818 = vmatpush.msra.mxu0 %v803
    %819 = vmatpush.msra.mxu0 %v800
    %820 = vmatpush.msra.mxu0 %v797
    %821 = vmatpush.msra.mxu0 %v794
    %822 = vmatpush.msra.mxu0 %v791
    %823 = vmatpush.msra.mxu0 %v788
    %824 = vmatpush.msra.mxu0 %v785
    %825 = vmatpush.msra.mxu0 %v782
    %826 = vmatpush.msra.mxu0 %v779
    %827 = vmatpush.msra.mxu0 %v776
    %828 = vmatpush.msra.mxu0 %v773
    %829 = vmatpush.msra.mxu0 %v770
    %830 = vmatpush.msra.mxu0 %v767
    %831 = vmatpush.msra.mxu0 %v764
    %832 = vmatpush.msra.mxu0 %v761
    %833 = vmatmul.f32.gmra.mxu0 %v756
    %v834 = vpop.f32.mrf.mxu0
    %v835 = vadd.f32 %v811, %v834
    %836 = vdwg.mxu0
    %837 = vmatpush.msra.mxu0 %v807
    %838 = vmatpush.msra.mxu0 %v804
    %839 = vmatpush.msra.mxu0 %v801
    %840 = vmatpush.msra.mxu0 %v798
    %841 = vmatpush.msra.mxu0 %v795
    %842 = vmatpush.msra.mxu0 %v792
    %843 = vmatpush.msra.mxu0 %v789
    %844 = vmatpush.msra.mxu0 %v786
    %845 = vmatpush.msra.mxu0 %v783
    %846 = vmatpush.msra.mxu0 %v780
    %847 = vmatpush.msra.mxu0 %v777
    %848 = vmatpush.msra.mxu0 %v774
    %849 = vmatpush.msra.mxu0 %v771
    %850 = vmatpush.msra.mxu0 %v768
    %851 = vmatpush.msra.mxu0 %v765
    %852 = vmatpush.msra.mxu0 %v762
    %853 = vmatmul.f32.gmra.mxu0 %v756
    %v854 = vpop.f32.mrf.mxu0
    %v855 = vadd.f32 %v812, %v854
    %856 = vdwg.mxu0
    %857 = vmatpush.msra.mxu0 %v808
    %858 = vmatpush.msra.mxu0 %v805
    %859 = vmatpush.msra.mxu0 %v802
    %860 = vmatpush.msra.mxu0 %v799
    %861 = vmatpush.msra.mxu0 %v796
    %862 = vmatpush.msra.mxu0 %v793
    %863 = vmatpush.msra.mxu0 %v790
    %864 = vmatpush.msra.mxu0 %v787
    %865 = vmatpush.msra.mxu0 %v784
    %866 = vmatpush.msra.mxu0 %v781
    %867 = vmatpush.msra.mxu0 %v778
    %868 = vmatpush.msra.mxu0 %v775
    %869 = vmatpush.msra.mxu0 %v772
    %870 = vmatpush.msra.mxu0 %v769
    %871 = vmatpush.msra.mxu0 %v766
    %872 = vmatpush.msra.mxu0 %v763
    %873 = vmatmul.f32.gmra.mxu0 %v756
    %v874 = vpop.f32.mrf.mxu0
    %v875 = vadd.f32 %v813, %v874
    %876 = vdwg.mxu0
    %v877 = vadd.f32 %v758, %v835
    %v878 = vxor.u32 %v877, 2147483648
    %v879 = vmul.f32 %v878, 1.442695
    %v880 = vpow.pop %v879
    %v881 = vadd.f32 %v880, 1.0
    %v882 = vrcp.pop %v881
    %v883 = vmul.f32 %v881, %v882
    %v884 = vsub.f32 1.0, %v883
    %v885 = vmul.f32 %v882, %v884
    %v886 = vadd.f32 %v882, %v885
    %vm887 = vweird.f32 %v881
    %vm888 = vweird.f32 %v882
    %vm889 = vmor %vm887, %vm888
    %v890 = vsel %vm889, %v882, %v886
    %v891 = vand.u32 2147483647, %v881
    %vm892 = vcmp.eq.f32.partialorder %v891, 8.507059e+37
    %v893 = vand.u32 %v881, 2147483648
    %v894 = vor.u32 1.1754944e-38, %v893
    %v895 = vsel %vm892, %v894, %v890
    %v896 = vmul.f32 1.0, %v895
    %v897 = vadd.f32 %v759, %v855
    %v898 = vxor.u32 %v897, 2147483648
    %v899 = vmul.f32 %v898, 1.442695
    %v900 = vpow.pop %v899
    %v901 = vadd.f32 %v900, 1.0
    %v902 = vrcp.pop %v901
    %v903 = vmul.f32 %v901, %v902
    %v904 = vsub.f32 1.0, %v903
    %v905 = vmul.f32 %v902, %v904
    %v906 = vadd.f32 %v902, %v905
    %vm907 = vweird.f32 %v901
    %vm908 = vweird.f32 %v902
    %vm909 = vmor %vm907, %vm908
    %v910 = vsel %vm909, %v902, %v906
    %v911 = vand.u32 2147483647, %v901
    %vm912 = vcmp.eq.f32.partialorder %v911, 8.507059e+37
    %v913 = vand.u32 %v901, 2147483648
    %v914 = vor.u32 1.1754944e-38, %v913
    %v915 = vsel %vm912, %v914, %v910
    %v916 = vmul.f32 1.0, %v915
    %v917 = vmul.f32 %v896, %v875
    %v918 = vadd.f32 %v760, %v917
    %v919 = vtanh.pop %v918
    %v920 = vsub.f32 1.0, %v916
    %v921 = vmul.f32 %v920, %v919
    %v922 = vmul.f32 %v916, %v756
    %v923 = vadd.f32 %v921, %v922
    %924 = vst [vmem:[#allocation2 + $0x18] sm:$0xff] %v923
    %v925 = vld [vmem:[#allocation3 + $0x60] sm:$0xff]
    %v926 = vld [vmem:[#allocation3 + $0x68] sm:$0xff]
    %v927 = vld [vmem:[#allocation3 + $0x70] sm:$0xff]
    %v928 = vld [vmem:[#allocation4] sm:$0xff]
    %v929 = vld [vmem:[#allocation4 + $0x8] sm:$0xff]
    %v930 = vld [vmem:[#allocation4 + $0x10] sm:$0xff]
    %v931 = vld [vmem:[#allocation4 + $0x18] sm:$0xff]
    %v932 = vld [vmem:[#allocation4 + $0x20] sm:$0xff]
    %v933 = vld [vmem:[#allocation4 + $0x28] sm:$0xff]
    %v934 = vld [vmem:[#allocation4 + $0x30] sm:$0xff]
    %v935 = vld [vmem:[#allocation4 + $0x38] sm:$0xff]
    %v936 = vld [vmem:[#allocation4 + $0x40] sm:$0xff]
    %v937 = vld [vmem:[#allocation4 + $0x48] sm:$0xff]
    %v938 = vld [vmem:[#allocation4 + $0x50] sm:$0xff]
    %v939 = vld [vmem:[#allocation4 + $0x58] sm:$0xff]
    %v940 = vld [vmem:[#allocation4 + $0x60] sm:$0xff]
    %v941 = vld [vmem:[#allocation4 + $0x68] sm:$0xff]
    %v942 = vld [vmem:[#allocation4 + $0x70] sm:$0xff]
    %v943 = vld [vmem:[#allocation4 + $0x78] sm:$0xff]
    %v944 = vld [vmem:[#allocation4 + $0x80] sm:$0xff]
    %v945 = vld [vmem:[#allocation4 + $0x88] sm:$0xff]
    %v946 = vld [vmem:[#allocation4 + $0x90] sm:$0xff]
    %v947 = vld [vmem:[#allocation4 + $0x98] sm:$0xff]
    %v948 = vld [vmem:[#allocation4 + $0xa0] sm:$0xff]
    %v949 = vld [vmem:[#allocation4 + $0xa8] sm:$0xff]
    %v950 = vld [vmem:[#allocation4 + $0xb0] sm:$0xff]
    %v951 = vld [vmem:[#allocation4 + $0xb8] sm:$0xff]
    %v952 = vld [vmem:[#allocation4 + $0xc0] sm:$0xff]
    %v953 = vld [vmem:[#allocation4 + $0xc8] sm:$0xff]
    %v954 = vld [vmem:[#allocation4 + $0xd0] sm:$0xff]
    %v955 = vld [vmem:[#allocation4 + $0xd8] sm:$0xff]
    %v956 = vld [vmem:[#allocation4 + $0xe0] sm:$0xff]
    %v957 = vld [vmem:[#allocation4 + $0xe8] sm:$0xff]
    %v958 = vld [vmem:[#allocation4 + $0xf0] sm:$0xff]
    %v959 = vld [vmem:[#allocation4 + $0xf8] sm:$0xff]
    %v960 = vld [vmem:[#allocation4 + $0x100] sm:$0xff]
    %v961 = vld [vmem:[#allocation4 + $0x108] sm:$0xff]
    %v962 = vld [vmem:[#allocation4 + $0x110] sm:$0xff]
    %v963 = vld [vmem:[#allocation4 + $0x118] sm:$0xff]
    %v964 = vld [vmem:[#allocation4 + $0x120] sm:$0xff]
    %v965 = vld [vmem:[#allocation4 + $0x128] sm:$0xff]
    %v966 = vld [vmem:[#allocation4 + $0x130] sm:$0xff]
    %v967 = vld [vmem:[#allocation4 + $0x138] sm:$0xff]
    %v968 = vld [vmem:[#allocation4 + $0x140] sm:$0xff]
    %v969 = vld [vmem:[#allocation4 + $0x148] sm:$0xff]
    %v970 = vld [vmem:[#allocation4 + $0x150] sm:$0xff]
    %v971 = vld [vmem:[#allocation4 + $0x158] sm:$0xff]
    %v972 = vld [vmem:[#allocation4 + $0x160] sm:$0xff]
    %v973 = vld [vmem:[#allocation4 + $0x168] sm:$0xff]
    %v974 = vld [vmem:[#allocation4 + $0x170] sm:$0xff]
    %v975 = vld [vmem:[#allocation4 + $0x178] sm:$0xff]
    %v976 = vld [vmem:[%s4] sm:$0x7]
    %v978 = vperm.slane %v976, 0
    %v979 = vperm.slane %v976, 1
    %v980 = vperm.slane %v976, 2
    %984 = vmatpush.msra.mxu0 %v973
    %985 = vmatpush.msra.mxu0 %v970
    %986 = vmatpush.msra.mxu0 %v967
    %987 = vmatpush.msra.mxu0 %v964
    %988 = vmatpush.msra.mxu0 %v961
    %989 = vmatpush.msra.mxu0 %v958
    %990 = vmatpush.msra.mxu0 %v955
    %991 = vmatpush.msra.mxu0 %v952
    %992 = vmatpush.msra.mxu0 %v949
    %993 = vmatpush.msra.mxu0 %v946
    %994 = vmatpush.msra.mxu0 %v943
    %995 = vmatpush.msra.mxu0 %v940
    %996 = vmatpush.msra.mxu0 %v937
    %997 = vmatpush.msra.mxu0 %v934
    %998 = vmatpush.msra.mxu0 %v931
    %999 = vmatpush.msra.mxu0 %v928
    %1000 = vmatmul.f32.gmra.mxu0 %v923
    %v1001 = vpop.f32.mrf.mxu0
    %v1002 = vadd.f32 %v978, %v1001
    %1003 = vdwg.mxu0
    %1004 = vmatpush.msra.mxu0 %v974
    %1005 = vmatpush.msra.mxu0 %v971
    %1006 = vmatpush.msra.mxu0 %v968
    %1007 = vmatpush.msra.mxu0 %v965
    %1008 = vmatpush.msra.mxu0 %v962
    %1009 = vmatpush.msra.mxu0 %v959
    %1010 = vmatpush.msra.mxu0 %v956
    %1011 = vmatpush.msra.mxu0 %v953
    %1012 = vmatpush.msra.mxu0 %v950
    %1013 = vmatpush.msra.mxu0 %v947
    %1014 = vmatpush.msra.mxu0 %v944
    %1015 = vmatpush.msra.mxu0 %v941
    %1016 = vmatpush.msra.mxu0 %v938
    %1017 = vmatpush.msra.mxu0 %v935
    %1018 = vmatpush.msra.mxu0 %v932
    %1019 = vmatpush.msra.mxu0 %v929
    %1020 = vmatmul.f32.gmra.mxu0 %v923
    %v1021 = vpop.f32.mrf.mxu0
    %v1022 = vadd.f32 %v979, %v1021
    %1023 = vdwg.mxu0
    %1024 = vmatpush.msra.mxu0 %v975
    %1025 = vmatpush.msra.mxu0 %v972
    %1026 = vmatpush.msra.mxu0 %v969
    %1027 = vmatpush.msra.mxu0 %v966
    %1028 = vmatpush.msra.mxu0 %v963
    %1029 = vmatpush.msra.mxu0 %v960
    %1030 = vmatpush.msra.mxu0 %v957
    %1031 = vmatpush.msra.mxu0 %v954
    %1032 = vmatpush.msra.mxu0 %v951
    %1033 = vmatpush.msra.mxu0 %v948
    %1034 = vmatpush.msra.mxu0 %v945
    %1035 = vmatpush.msra.mxu0 %v942
    %1036 = vmatpush.msra.mxu0 %v939
    %1037 = vmatpush.msra.mxu0 %v936
    %1038 = vmatpush.msra.mxu0 %v933
    %1039 = vmatpush.msra.mxu0 %v930
    %1040 = vmatmul.f32.gmra.mxu0 %v923
    %v1041 = vpop.f32.mrf.mxu0
    %v1042 = vadd.f32 %v980, %v1041
    %1043 = vdwg.mxu0
    %v1044 = vadd.f32 %v925, %v1002
    %v1045 = vxor.u32 %v1044, 2147483648
    %v1046 = vmul.f32 %v1045, 1.442695
    %v1047 = vpow.pop %v1046
    %v1048 = vadd.f32 %v1047, 1.0
    %v1049 = vrcp.pop %v1048
    %v1050 = vmul.f32 %v1048, %v1049
    %v1051 = vsub.f32 1.0, %v1050
    %v1052 = vmul.f32 %v1049, %v1051
    %v1053 = vadd.f32 %v1049, %v1052
    %vm1054 = vweird.f32 %v1048
    %vm1055 = vweird.f32 %v1049
    %vm1056 = vmor %vm1054, %vm1055
    %v1057 = vsel %vm1056, %v1049, %v1053
    %v1058 = vand.u32 2147483647, %v1048
    %vm1059 = vcmp.eq.f32.partialorder %v1058, 8.507059e+37
    %v1060 = vand.u32 %v1048, 2147483648
    %v1061 = vor.u32 1.1754944e-38, %v1060
    %v1062 = vsel %vm1059, %v1061, %v1057
    %v1063 = vmul.f32 1.0, %v1062
    %v1064 = vadd.f32 %v926, %v1022
    %v1065 = vxor.u32 %v1064, 2147483648
    %v1066 = vmul.f32 %v1065, 1.442695
    %v1067 = vpow.pop %v1066
    %v1068 = vadd.f32 %v1067, 1.0
    %v1069 = vrcp.pop %v1068
    %v1070 = vmul.f32 %v1068, %v1069
    %v1071 = vsub.f32 1.0, %v1070
    %v1072 = vmul.f32 %v1069, %v1071
    %v1073 = vadd.f32 %v1069, %v1072
    %vm1074 = vweird.f32 %v1068
    %vm1075 = vweird.f32 %v1069
    %vm1076 = vmor %vm1074, %vm1075
    %v1077 = vsel %vm1076, %v1069, %v1073
    %v1078 = vand.u32 2147483647, %v1068
    %vm1079 = vcmp.eq.f32.partialorder %v1078, 8.507059e+37
    %v1080 = vand.u32 %v1068, 2147483648
    %v1081 = vor.u32 1.1754944e-38, %v1080
    %v1082 = vsel %vm1079, %v1081, %v1077
    %v1083 = vmul.f32 1.0, %v1082
    %v1084 = vmul.f32 %v1063, %v1042
    %v1085 = vadd.f32 %v927, %v1084
    %v1086 = vtanh.pop %v1085
    %v1087 = vsub.f32 1.0, %v1083
    %v1088 = vmul.f32 %v1087, %v1086
    %v1089 = vmul.f32 %v1083, %v923
    %v1090 = vadd.f32 %v1088, %v1089
    %1091 = vst [vmem:[#allocation2 + $0x20] sm:$0xff] %v1090
    %v1092 = vld [vmem:[#allocation3 + $0x78] sm:$0xff]
    %v1093 = vld [vmem:[#allocation3 + $0x80] sm:$0xff]
    %v1094 = vld [vmem:[#allocation3 + $0x88] sm:$0xff]
    %v1095 = vld [vmem:[#allocation4] sm:$0xff]
    %v1096 = vld [vmem:[#allocation4 + $0x8] sm:$0xff]
    %v1097 = vld [vmem:[#allocation4 + $0x10] sm:$0xff]
    %v1098 = vld [vmem:[#allocation4 + $0x18] sm:$0xff]
    %v1099 = vld [vmem:[#allocation4 + $0x20] sm:$0xff]
    %v1100 = vld [vmem:[#allocation4 + $0x28] sm:$0xff]
    %v1101 = vld [vmem:[#allocation4 + $0x30] sm:$0xff]
    %v1102 = vld [vmem:[#allocation4 + $0x38] sm:$0xff]
    %v1103 = vld [vmem:[#allocation4 + $0x40] sm:$0xff]
    %v1104 = vld [vmem:[#allocation4 + $0x48] sm:$0xff]
    %v1105 = vld [vmem:[#allocation4 + $0x50] sm:$0xff]
    %v1106 = vld [vmem:[#allocation4 + $0x58] sm:$0xff]
    %v1107 = vld [vmem:[#allocation4 + $0x60] sm:$0xff]
    %v1108 = vld [vmem:[#allocation4 + $0x68] sm:$0xff]
    %v1109 = vld [vmem:[#allocation4 + $0x70] sm:$0xff]
    %v1110 = vld [vmem:[#allocation4 + $0x78] sm:$0xff]
    %v1111 = vld [vmem:[#allocation4 + $0x80] sm:$0xff]
    %v1112 = vld [vmem:[#allocation4 + $0x88] sm:$0xff]
    %v1113 = vld [vmem:[#allocation4 + $0x90] sm:$0xff]
    %v1114 = vld [vmem:[#allocation4 + $0x98] sm:$0xff]
    %v1115 = vld [vmem:[#allocation4 + $0xa0] sm:$0xff]
    %v1116 = vld [vmem:[#allocation4 + $0xa8] sm:$0xff]
    %v1117 = vld [vmem:[#allocation4 + $0xb0] sm:$0xff]
    %v1118 = vld [vmem:[#allocation4 + $0xb8] sm:$0xff]
    %v1119 = vld [vmem:[#allocation4 + $0xc0] sm:$0xff]
    %v1120 = vld [vmem:[#allocation4 + $0xc8] sm:$0xff]
    %v1121 = vld [vmem:[#allocation4 + $0xd0] sm:$0xff]
    %v1122 = vld [vmem:[#allocation4 + $0xd8] sm:$0xff]
    %v1123 = vld [vmem:[#allocation4 + $0xe0] sm:$0xff]
    %v1124 = vld [vmem:[#allocation4 + $0xe8] sm:$0xff]
    %v1125 = vld [vmem:[#allocation4 + $0xf0] sm:$0xff]
    %v1126 = vld [vmem:[#allocation4 + $0xf8] sm:$0xff]
    %v1127 = vld [vmem:[#allocation4 + $0x100] sm:$0xff]
    %v1128 = vld [vmem:[#allocation4 + $0x108] sm:$0xff]
    %v1129 = vld [vmem:[#allocation4 + $0x110] sm:$0xff]
    %v1130 = vld [vmem:[#allocation4 + $0x118] sm:$0xff]
    %v1131 = vld [vmem:[#allocation4 + $0x120] sm:$0xff]
    %v1132 = vld [vmem:[#allocation4 + $0x128] sm:$0xff]
    %v1133 = vld [vmem:[#allocation4 + $0x130] sm:$0xff]
    %v1134 = vld [vmem:[#allocation4 + $0x138] sm:$0xff]
    %v1135 = vld [vmem:[#allocation4 + $0x140] sm:$0xff]
    %v1136 = vld [vmem:[#allocation4 + $0x148] sm:$0xff]
    %v1137 = vld [vmem:[#allocation4 + $0x150] sm:$0xff]
    %v1138 = vld [vmem:[#allocation4 + $0x158] sm:$0xff]
    %v1139 = vld [vmem:[#allocation4 + $0x160] sm:$0xff]
    %v1140 = vld [vmem:[#allocation4 + $0x168] sm:$0xff]
    %v1141 = vld [vmem:[#allocation4 + $0x170] sm:$0xff]
    %v1142 = vld [vmem:[#allocation4 + $0x178] sm:$0xff]
    %v1143 = vld [vmem:[%s4] sm:$0x7]
    %v1145 = vperm.slane %v1143, 0
    %v1146 = vperm.slane %v1143, 1
    %v1147 = vperm.slane %v1143, 2
    %1151 = vmatpush.msra.mxu0 %v1140
    %1152 = vmatpush.msra.mxu0 %v1137
    %1153 = vmatpush.msra.mxu0 %v1134
    %1154 = vmatpush.msra.mxu0 %v1131
    %1155 = vmatpush.msra.mxu0 %v1128
    %1156 = vmatpush.msra.mxu0 %v1125
    %1157 = vmatpush.msra.mxu0 %v1122
    %1158 = vmatpush.msra.mxu0 %v1119
    %1159 = vmatpush.msra.mxu0 %v1116
    %1160 = vmatpush.msra.mxu0 %v1113
    %1161 = vmatpush.msra.mxu0 %v1110
    %1162 = vmatpush.msra.mxu0 %v1107
    %1163 = vmatpush.msra.mxu0 %v1104
    %1164 = vmatpush.msra.mxu0 %v1101
    %1165 = vmatpush.msra.mxu0 %v1098
    %1166 = vmatpush.msra.mxu0 %v1095
    %1167 = vmatmul.f32.gmra.mxu0 %v1090
    %v1168 = vpop.f32.mrf.mxu0
    %v1169 = vadd.f32 %v1145, %v1168
    %1170 = vdwg.mxu0
    %1171 = vmatpush.msra.mxu0 %v1141
    %1172 = vmatpush.msra.mxu0 %v1138
    %1173 = vmatpush.msra.mxu0 %v1135
    %1174 = vmatpush.msra.mxu0 %v1132
    %1175 = vmatpush.msra.mxu0 %v1129
    %1176 = vmatpush.msra.mxu0 %v1126
    %1177 = vmatpush.msra.mxu0 %v1123
    %1178 = vmatpush.msra.mxu0 %v1120
    %1179 = vmatpush.msra.mxu0 %v1117
    %1180 = vmatpush.msra.mxu0 %v1114
    %1181 = vmatpush.msra.mxu0 %v1111
    %1182 = vmatpush.msra.mxu0 %v1108
    %1183 = vmatpush.msra.mxu0 %v1105
    %1184 = vmatpush.msra.mxu0 %v1102
    %1185 = vmatpush.msra.mxu0 %v1099
    %1186 = vmatpush.msra.mxu0 %v1096
    %1187 = vmatmul.f32.gmra.mxu0 %v1090
    %v1188 = vpop.f32.mrf.mxu0
    %v1189 = vadd.f32 %v1146, %v1188
    %1190 = vdwg.mxu0
    %1191 = vmatpush.msra.mxu0 %v1142
    %1192 = vmatpush.msra.mxu0 %v1139
    %1193 = vmatpush.msra.mxu0 %v1136
    %1194 = vmatpush.msra.mxu0 %v1133
    %1195 = vmatpush.msra.mxu0 %v1130
    %1196 = vmatpush.msra.mxu0 %v1127
    %1197 = vmatpush.msra.mxu0 %v1124
    %1198 = vmatpush.msra.mxu0 %v1121
    %1199 = vmatpush.msra.mxu0 %v1118
    %1200 = vmatpush.msra.mxu0 %v1115
    %1201 = vmatpush.msra.mxu0 %v1112
    %1202 = vmatpush.msra.mxu0 %v1109
    %1203 = vmatpush.msra.mxu0 %v1106
    %1204 = vmatpush.msra.mxu0 %v1103
    %1205 = vmatpush.msra.mxu0 %v1100
    %1206 = vmatpush.msra.mxu0 %v1097
    %1207 = vmatmul.f32.gmra.mxu0 %v1090
    %v1208 = vpop.f32.mrf.mxu0
    %v1209 = vadd.f32 %v1147, %v1208
    %1210 = vdwg.mxu0
    %v1211 = vadd.f32 %v1092, %v1169
    %v1212 = vxor.u32 %v1211, 2147483648
    %v1213 = vmul.f32 %v1212, 1.442695
    %v1214 = vpow.pop %v1213
    %v1215 = vadd.f32 %v1214, 1.0
    %v1216 = vrcp.pop %v1215
    %v1217 = vmul.f32 %v1215, %v1216
    %v1218 = vsub.f32 1.0, %v1217
    %v1219 = vmul.f32 %v1216, %v1218
    %v1220 = vadd.f32 %v1216, %v1219
    %vm1221 = vweird.f32 %v1215
    %vm1222 = vweird.f32 %v1216
    %vm1223 = vmor %vm1221, %vm1222
    %v1224 = vsel %vm1223, %v1216, %v1220
    %v1225 = vand.u32 2147483647, %v1215
    %vm1226 = vcmp.eq.f32.partialorder %v1225, 8.507059e+37
    %v1227 = vand.u32 %v1215, 2147483648
    %v1228 = vor.u32 1.1754944e-38, %v1227
    %v1229 = vsel %vm1226, %v1228, %v1224
    %v1230 = vmul.f32 1.0, %v1229
    %v1231 = vadd.f32 %v1093, %v1189
    %v1232 = vxor.u32 %v1231, 2147483648
    %v1233 = vmul.f32 %v1232, 1.442695
    %v1234 = vpow.pop %v1233
    %v1235 = vadd.f32 %v1234, 1.0
    %v1236 = vrcp.pop %v1235
    %v1237 = vmul.f32 %v1235, %v1236
    %v1238 = vsub.f32 1.0, %v1237
    %v1239 = vmul.f32 %v1236, %v1238
    %v1240 = vadd.f32 %v1236, %v1239
    %vm1241 = vweird.f32 %v1235
    %vm1242 = vweird.f32 %v1236
    %vm1243 = vmor %vm1241, %vm1242
    %v1244 = vsel %vm1243, %v1236, %v1240
    %v1245 = vand.u32 2147483647, %v1235
    %vm1246 = vcmp.eq.f32.partialorder %v1245, 8.507059e+37
    %v1247 = vand.u32 %v1235, 2147483648
    %v1248 = vor.u32 1.1754944e-38, %v1247
    %v1249 = vsel %vm1246, %v1248, %v1244
    %v1250 = vmul.f32 1.0, %v1249
    %v1251 = vmul.f32 %v1230, %v1209
    %v1252 = vadd.f32 %v1094, %v1251
    %v1253 = vtanh.pop %v1252
    %v1254 = vsub.f32 1.0, %v1250
    %v1255 = vmul.f32 %v1254, %v1253
    %v1256 = vmul.f32 %v1250, %v1090
    %v1257 = vadd.f32 %v1255, %v1256
    %1258 = vst [vmem:[#allocation2 + $0x28] sm:$0xff] %v1257
    %v1259 = vld [vmem:[#allocation3 + $0x90] sm:$0xff]
    %v1260 = vld [vmem:[#allocation3 + $0x98] sm:$0xff]
    %v1261 = vld [vmem:[#allocation3 + $0xa0] sm:$0xff]
    %v1262 = vld [vmem:[#allocation4] sm:$0xff]
    %v1263 = vld [vmem:[#allocation4 + $0x8] sm:$0xff]
    %v1264 = vld [vmem:[#allocation4 + $0x10] sm:$0xff]
    %v1265 = vld [vmem:[#allocation4 + $0x18] sm:$0xff]
    %v1266 = vld [vmem:[#allocation4 + $0x20] sm:$0xff]
    %v1267 = vld [vmem:[#allocation4 + $0x28] sm:$0xff]
    %v1268 = vld [vmem:[#allocation4 + $0x30] sm:$0xff]
    %v1269 = vld [vmem:[#allocation4 + $0x38] sm:$0xff]
    %v1270 = vld [vmem:[#allocation4 + $0x40] sm:$0xff]
    %v1271 = vld [vmem:[#allocation4 + $0x48] sm:$0xff]
    %v1272 = vld [vmem:[#allocation4 + $0x50] sm:$0xff]
    %v1273 = vld [vmem:[#allocation4 + $0x58] sm:$0xff]
    %v1274 = vld [vmem:[#allocation4 + $0x60] sm:$0xff]
    %v1275 = vld [vmem:[#allocation4 + $0x68] sm:$0xff]
    %v1276 = vld [vmem:[#allocation4 + $0x70] sm:$0xff]
    %v1277 = vld [vmem:[#allocation4 + $0x78] sm:$0xff]
    %v1278 = vld [vmem:[#allocation4 + $0x80] sm:$0xff]
    %v1279 = vld [vmem:[#allocation4 + $0x88] sm:$0xff]
    %v1280 = vld [vmem:[#allocation4 + $0x90] sm:$0xff]
    %v1281 = vld [vmem:[#allocation4 + $0x98] sm:$0xff]
    %v1282 = vld [vmem:[#allocation4 + $0xa0] sm:$0xff]
    %v1283 = vld [vmem:[#allocation4 + $0xa8] sm:$0xff]
    %v1284 = vld [vmem:[#allocation4 + $0xb0] sm:$0xff]
    %v1285 = vld [vmem:[#allocation4 + $0xb8] sm:$0xff]
    %v1286 = vld [vmem:[#allocation4 + $0xc0] sm:$0xff]
    %v1287 = vld [vmem:[#allocation4 + $0xc8] sm:$0xff]
    %v1288 = vld [vmem:[#allocation4 + $0xd0] sm:$0xff]
    %v1289 = vld [vmem:[#allocation4 + $0xd8] sm:$0xff]
    %v1290 = vld [vmem:[#allocation4 + $0xe0] sm:$0xff]
    %v1291 = vld [vmem:[#allocation4 + $0xe8] sm:$0xff]
    %v1292 = vld [vmem:[#allocation4 + $0xf0] sm:$0xff]
    %v1293 = vld [vmem:[#allocation4 + $0xf8] sm:$0xff]
    %v1294 = vld [vmem:[#allocation4 + $0x100] sm:$0xff]
    %v1295 = vld [vmem:[#allocation4 + $0x108] sm:$0xff]
    %v1296 = vld [vmem:[#allocation4 + $0x110] sm:$0xff]
    %v1297 = vld [vmem:[#allocation4 + $0x118] sm:$0xff]
    %v1298 = vld [vmem:[#allocation4 + $0x120] sm:$0xff]
    %v1299 = vld [vmem:[#allocation4 + $0x128] sm:$0xff]
    %v1300 = vld [vmem:[#allocation4 + $0x130] sm:$0xff]
    %v1301 = vld [vmem:[#allocation4 + $0x138] sm:$0xff]
    %v1302 = vld [vmem:[#allocation4 + $0x140] sm:$0xff]
    %v1303 = vld [vmem:[#allocation4 + $0x148] sm:$0xff]
    %v1304 = vld [vmem:[#allocation4 + $0x150] sm:$0xff]
    %v1305 = vld [vmem:[#allocation4 + $0x158] sm:$0xff]
    %v1306 = vld [vmem:[#allocation4 + $0x160] sm:$0xff]
    %v1307 = vld [vmem:[#allocation4 + $0x168] sm:$0xff]
    %v1308 = vld [vmem:[#allocation4 + $0x170] sm:$0xff]
    %v1309 = vld [vmem:[#allocation4 + $0x178] sm:$0xff]
    %v1310 = vld [vmem:[%s4] sm:$0x7]
    %v1312 = vperm.slane %v1310, 0
    %v1313 = vperm.slane %v1310, 1
    %v1314 = vperm.slane %v1310, 2
    %1318 = vmatpush.msra.mxu0 %v1307
    %1319 = vmatpush.msra.mxu0 %v1304
    %1320 = vmatpush.msra.mxu0 %v1301
    %1321 = vmatpush.msra.mxu0 %v1298
    %1322 = vmatpush.msra.mxu0 %v1295
    %1323 = vmatpush.msra.mxu0 %v1292
    %1324 = vmatpush.msra.mxu0 %v1289
    %1325 = vmatpush.msra.mxu0 %v1286
    %1326 = vmatpush.msra.mxu0 %v1283
    %1327 = vmatpush.msra.mxu0 %v1280
    %1328 = vmatpush.msra.mxu0 %v1277
    %1329 = vmatpush.msra.mxu0 %v1274
    %1330 = vmatpush.msra.mxu0 %v1271
    %1331 = vmatpush.msra.mxu0 %v1268
    %1332 = vmatpush.msra.mxu0 %v1265
    %1333 = vmatpush.msra.mxu0 %v1262
    %1334 = vmatmul.f32.gmra.mxu0 %v1257
    %v1335 = vpop.f32.mrf.mxu0
    %v1336 = vadd.f32 %v1312, %v1335
    %1337 = vdwg.mxu0
    %1338 = vmatpush.msra.mxu0 %v1308
    %1339 = vmatpush.msra.mxu0 %v1305
    %1340 = vmatpush.msra.mxu0 %v1302
    %1341 = vmatpush.msra.mxu0 %v1299
    %1342 = vmatpush.msra.mxu0 %v1296
    %1343 = vmatpush.msra.mxu0 %v1293
    %1344 = vmatpush.msra.mxu0 %v1290
    %1345 = vmatpush.msra.mxu0 %v1287
    %1346 = vmatpush.msra.mxu0 %v1284
    %1347 = vmatpush.msra.mxu0 %v1281
    %1348 = vmatpush.msra.mxu0 %v1278
    %1349 = vmatpush.msra.mxu0 %v1275
    %1350 = vmatpush.msra.mxu0 %v1272
    %1351 = vmatpush.msra.mxu0 %v1269
    %1352 = vmatpush.msra.mxu0 %v1266
    %1353 = vmatpush.msra.mxu0 %v1263
    %1354 = vmatmul.f32.gmra.mxu0 %v1257
    %v1355 = vpop.f32.mrf.mxu0
    %v1356 = vadd.f32 %v1313, %v1355
    %1357 = vdwg.mxu0
    %1358 = vmatpush.msra.mxu0 %v1309
    %1359 = vmatpush.msra.mxu0 %v1306
    %1360 = vmatpush.msra.mxu0 %v1303
    %1361 = vmatpush.msra.mxu0 %v1300
    %1362 = vmatpush.msra.mxu0 %v1297
    %1363 = vmatpush.msra.mxu0 %v1294
    %1364 = vmatpush.msra.mxu0 %v1291
    %1365 = vmatpush.msra.mxu0 %v1288
    %1366 = vmatpush.msra.mxu0 %v1285
    %1367 = vmatpush.msra.mxu0 %v1282
    %1368 = vmatpush.msra.mxu0 %v1279
    %1369 = vmatpush.msra.mxu0 %v1276
    %1370 = vmatpush.msra.mxu0 %v1273
    %1371 = vmatpush.msra.mxu0 %v1270
    %1372 = vmatpush.msra.mxu0 %v1267
    %1373 = vmatpush.msra.mxu0 %v1264
    %1374 = vmatmul.f32.gmra.mxu0 %v1257
    %v1375 = vpop.f32.mrf.mxu0
    %v1376 = vadd.f32 %v1314, %v1375
    %1377 = vdwg.mxu0
    %v1378 = vadd.f32 %v1259, %v1336
    %v1379 = vxor.u32 %v1378, 2147483648
    %v1380 = vmul.f32 %v1379, 1.442695
    %v1381 = vpow.pop %v1380
    %v1382 = vadd.f32 %v1381, 1.0
    %v1383 = vrcp.pop %v1382
    %v1384 = vmul.f32 %v1382, %v1383
    %v1385 = vsub.f32 1.0, %v1384
    %v1386 = vmul.f32 %v1383, %v1385
    %v1387 = vadd.f32 %v1383, %v1386
    %vm1388 = vweird.f32 %v1382
    %vm1389 = vweird.f32 %v1383
    %vm1390 = vmor %vm1388, %vm1389
    %v1391 = vsel %vm1390, %v1383, %v1387
    %v1392 = vand.u32 2147483647, %v1382
    %vm1393 = vcmp.eq.f32.partialorder %v1392, 8.507059e+37
    %v1394 = vand.u32 %v1382, 2147483648
    %v1395 = vor.u32 1.1754944e-38, %v1394
    %v1396 = vsel %vm1393, %v1395, %v1391
    %v1397 = vmul.f32 1.0, %v1396
    %v1398 = vadd.f32 %v1260, %v1356
    %v1399 = vxor.u32 %v1398, 2147483648
    %v1400 = vmul.f32 %v1399, 1.442695
    %v1401 = vpow.pop %v1400
    %v1402 = vadd.f32 %v1401, 1.0
    %v1403 = vrcp.pop %v1402
    %v1404 = vmul.f32 %v1402, %v1403
    %v1405 = vsub.f32 1.0, %v1404
    %v1406 = vmul.f32 %v1403, %v1405
    %v1407 = vadd.f32 %v1403, %v1406
    %vm1408 = vweird.f32 %v1402
    %vm1409 = vweird.f32 %v1403
    %vm1410 = vmor %vm1408, %vm1409
    %v1411 = vsel %vm1410, %v1403, %v1407
    %v1412 = vand.u32 2147483647, %v1402
    %vm1413 = vcmp.eq.f32.partialorder %v1412, 8.507059e+37
    %v1414 = vand.u32 %v1402, 2147483648
    %v1415 = vor.u32 1.1754944e-38, %v1414
    %v1416 = vsel %vm1413, %v1415, %v1411
    %v1417 = vmul.f32 1.0, %v1416
    %v1418 = vmul.f32 %v1397, %v1376
    %v1419 = vadd.f32 %v1261, %v1418
    %v1420 = vtanh.pop %v1419
    %v1421 = vsub.f32 1.0, %v1417
    %v1422 = vmul.f32 %v1421, %v1420
    %v1423 = vmul.f32 %v1417, %v1257
    %v1424 = vadd.f32 %v1422, %v1423
    %1425 = vst [vmem:[#allocation2 + $0x30] sm:$0xff] %v1424
    %v1426 = vld [vmem:[#allocation3 + $0xa8] sm:$0xff]
    %v1427 = vld [vmem:[#allocation3 + $0xb0] sm:$0xff]
    %v1428 = vld [vmem:[#allocation3 + $0xb8] sm:$0xff]
    %v1429 = vld [vmem:[#allocation4] sm:$0xff]
    %v1430 = vld [vmem:[#allocation4 + $0x8] sm:$0xff]
    %v1431 = vld [vmem:[#allocation4 + $0x10] sm:$0xff]
    %v1432 = vld [vmem:[#allocation4 + $0x18] sm:$0xff]
    %v1433 = vld [vmem:[#allocation4 + $0x20] sm:$0xff]
    %v1434 = vld [vmem:[#allocation4 + $0x28] sm:$0xff]
    %v1435 = vld [vmem:[#allocation4 + $0x30] sm:$0xff]
    %v1436 = vld [vmem:[#allocation4 + $0x38] sm:$0xff]
    %v1437 = vld [vmem:[#allocation4 + $0x40] sm:$0xff]
    %v1438 = vld [vmem:[#allocation4 + $0x48] sm:$0xff]
    %v1439 = vld [vmem:[#allocation4 + $0x50] sm:$0xff]
    %v1440 = vld [vmem:[#allocation4 + $0x58] sm:$0xff]
    %v1441 = vld [vmem:[#allocation4 + $0x60] sm:$0xff]
    %v1442 = vld [vmem:[#allocation4 + $0x68] sm:$0xff]
    %v1443 = vld [vmem:[#allocation4 + $0x70] sm:$0xff]
    %v1444 = vld [vmem:[#allocation4 + $0x78] sm:$0xff]
    %v1445 = vld [vmem:[#allocation4 + $0x80] sm:$0xff]
    %v1446 = vld [vmem:[#allocation4 + $0x88] sm:$0xff]
    %v1447 = vld [vmem:[#allocation4 + $0x90] sm:$0xff]
    %v1448 = vld [vmem:[#allocation4 + $0x98] sm:$0xff]
    %v1449 = vld [vmem:[#allocation4 + $0xa0] sm:$0xff]
    %v1450 = vld [vmem:[#allocation4 + $0xa8] sm:$0xff]
    %v1451 = vld [vmem:[#allocation4 + $0xb0] sm:$0xff]
    %v1452 = vld [vmem:[#allocation4 + $0xb8] sm:$0xff]
    %v1453 = vld [vmem:[#allocation4 + $0xc0] sm:$0xff]
    %v1454 = vld [vmem:[#allocation4 + $0xc8] sm:$0xff]
    %v1455 = vld [vmem:[#allocation4 + $0xd0] sm:$0xff]
    %v1456 = vld [vmem:[#allocation4 + $0xd8] sm:$0xff]
    %v1457 = vld [vmem:[#allocation4 + $0xe0] sm:$0xff]
    %v1458 = vld [vmem:[#allocation4 + $0xe8] sm:$0xff]
    %v1459 = vld [vmem:[#allocation4 + $0xf0] sm:$0xff]
    %v1460 = vld [vmem:[#allocation4 + $0xf8] sm:$0xff]
    %v1461 = vld [vmem:[#allocation4 + $0x100] sm:$0xff]
    %v1462 = vld [vmem:[#allocation4 + $0x108] sm:$0xff]
    %v1463 = vld [vmem:[#allocation4 + $0x110] sm:$0xff]
    %v1464 = vld [vmem:[#allocation4 + $0x118] sm:$0xff]
    %v1465 = vld [vmem:[#allocation4 + $0x120] sm:$0xff]
    %v1466 = vld [vmem:[#allocation4 + $0x128] sm:$0xff]
    %v1467 = vld [vmem:[#allocation4 + $0x130] sm:$0xff]
    %v1468 = vld [vmem:[#allocation4 + $0x138] sm:$0xff]
    %v1469 = vld [vmem:[#allocation4 + $0x140] sm:$0xff]
    %v1470 = vld [vmem:[#allocation4 + $0x148] sm:$0xff]
    %v1471 = vld [vmem:[#allocation4 + $0x150] sm:$0xff]
    %v1472 = vld [vmem:[#allocation4 + $0x158] sm:$0xff]
    %v1473 = vld [vmem:[#allocation4 + $0x160] sm:$0xff]
    %v1474 = vld [vmem:[#allocation4 + $0x168] sm:$0xff]
    %v1475 = vld [vmem:[#allocation4 + $0x170] sm:$0xff]
    %v1476 = vld [vmem:[#allocation4 + $0x178] sm:$0xff]
    %v1477 = vld [vmem:[%s4] sm:$0x7]
    %v1479 = vperm.slane %v1477, 0
    %v1480 = vperm.slane %v1477, 1
    %v1481 = vperm.slane %v1477, 2
    %1485 = vmatpush.msra.mxu0 %v1474
    %1486 = vmatpush.msra.mxu0 %v1471
    %1487 = vmatpush.msra.mxu0 %v1468
    %1488 = vmatpush.msra.mxu0 %v1465
    %1489 = vmatpush.msra.mxu0 %v1462
    %1490 = vmatpush.msra.mxu0 %v1459
    %1491 = vmatpush.msra.mxu0 %v1456
    %1492 = vmatpush.msra.mxu0 %v1453
    %1493 = vmatpush.msra.mxu0 %v1450
    %1494 = vmatpush.msra.mxu0 %v1447
    %1495 = vmatpush.msra.mxu0 %v1444
    %1496 = vmatpush.msra.mxu0 %v1441
    %1497 = vmatpush.msra.mxu0 %v1438
    %1498 = vmatpush.msra.mxu0 %v1435
    %1499 = vmatpush.msra.mxu0 %v1432
    %1500 = vmatpush.msra.mxu0 %v1429
    %1501 = vmatmul.f32.gmra.mxu0 %v1424
    %v1502 = vpop.f32.mrf.mxu0
    %v1503 = vadd.f32 %v1479, %v1502
    %1504 = vdwg.mxu0
    %1505 = vmatpush.msra.mxu0 %v1475
    %1506 = vmatpush.msra.mxu0 %v1472
    %1507 = vmatpush.msra.mxu0 %v1469
    %1508 = vmatpush.msra.mxu0 %v1466
    %1509 = vmatpush.msra.mxu0 %v1463
    %1510 = vmatpush.msra.mxu0 %v1460
    %1511 = vmatpush.msra.mxu0 %v1457
    %1512 = vmatpush.msra.mxu0 %v1454
    %1513 = vmatpush.msra.mxu0 %v1451
    %1514 = vmatpush.msra.mxu0 %v1448
    %1515 = vmatpush.msra.mxu0 %v1445
    %1516 = vmatpush.msra.mxu0 %v1442
    %1517 = vmatpush.msra.mxu0 %v1439
    %1518 = vmatpush.msra.mxu0 %v1436
    %1519 = vmatpush.msra.mxu0 %v1433
    %1520 = vmatpush.msra.mxu0 %v1430
    %1521 = vmatmul.f32.gmra.mxu0 %v1424
    %v1522 = vpop.f32.mrf.mxu0
    %v1523 = vadd.f32 %v1480, %v1522
    %1524 = vdwg.mxu0
    %1525 = vmatpush.msra.mxu0 %v1476
    %1526 = vmatpush.msra.mxu0 %v1473
    %1527 = vmatpush.msra.mxu0 %v1470
    %1528 = vmatpush.msra.mxu0 %v1467
    %1529 = vmatpush.msra.mxu0 %v1464
    %1530 = vmatpush.msra.mxu0 %v1461
    %1531 = vmatpush.msra.mxu0 %v1458
    %1532 = vmatpush.msra.mxu0 %v1455
    %1533 = vmatpush.msra.mxu0 %v1452
    %1534 = vmatpush.msra.mxu0 %v1449
    %1535 = vmatpush.msra.mxu0 %v1446
    %1536 = vmatpush.msra.mxu0 %v1443
    %1537 = vmatpush.msra.mxu0 %v1440
    %1538 = vmatpush.msra.mxu0 %v1437
    %1539 = vmatpush.msra.mxu0 %v1434
    %1540 = vmatpush.msra.mxu0 %v1431
    %1541 = vmatmul.f32.gmra.mxu0 %v1424
    %v1542 = vpop.f32.mrf.mxu0
    %v1543 = vadd.f32 %v1481, %v1542
    %1544 = vdwg.mxu0
    %v1545 = vadd.f32 %v1426, %v1503
    %v1546 = vxor.u32 %v1545, 2147483648
    %v1547 = vmul.f32 %v1546, 1.442695
    %v1548 = vpow.pop %v1547
    %v1549 = vadd.f32 %v1548, 1.0
    %v1550 = vrcp.pop %v1549
    %v1551 = vmul.f32 %v1549, %v1550
    %v1552 = vsub.f32 1.0, %v1551
    %v1553 = vmul.f32 %v1550, %v1552
    %v1554 = vadd.f32 %v1550, %v1553
    %vm1555 = vweird.f32 %v1549
    %vm1556 = vweird.f32 %v1550
    %vm1557 = vmor %vm1555, %vm1556
    %v1558 = vsel %vm1557, %v1550, %v1554
    %v1559 = vand.u32 2147483647, %v1549
    %vm1560 = vcmp.eq.f32.partialorder %v1559, 8.507059e+37
    %v1561 = vand.u32 %v1549, 2147483648
    %v1562 = vor.u32 1.1754944e-38, %v1561
    %v1563 = vsel %vm1560, %v1562, %v1558
    %v1564 = vmul.f32 1.0, %v1563
    %v1565 = vadd.f32 %v1427, %v1523
    %v1566 = vxor.u32 %v1565, 2147483648
    %v1567 = vmul.f32 %v1566, 1.442695
    %v1568 = vpow.pop %v1567
    %v1569 = vadd.f32 %v1568, 1.0
    %v1570 = vrcp.pop %v1569
    %v1571 = vmul.f32 %v1569, %v1570
    %v1572 = vsub.f32 1.0, %v1571
    %v1573 = vmul.f32 %v1570, %v1572
    %v1574 = vadd.f32 %v1570, %v1573
    %vm1575 = vweird.f32 %v1569
    %vm1576 = vweird.f32 %v1570
    %vm1577 = vmor %vm1575, %vm1576
    %v1578 = vsel %vm1577, %v1570, %v1574
    %v1579 = vand.u32 2147483647, %v1569
    %vm1580 = vcmp.eq.f32.partialorder %v1579, 8.507059e+37
    %v1581 = vand.u32 %v1569, 2147483648
    %v1582 = vor.u32 1.1754944e-38, %v1581
    %v1583 = vsel %vm1580, %v1582, %v1578
    %v1584 = vmul.f32 1.0, %v1583
    %v1585 = vmul.f32 %v1564, %v1543
    %v1586 = vadd.f32 %v1428, %v1585
    %v1587 = vtanh.pop %v1586
    %v1588 = vsub.f32 1.0, %v1584
    %v1589 = vmul.f32 %v1588, %v1587
    %v1590 = vmul.f32 %v1584, %v1424
    %v1591 = vadd.f32 %v1589, %v1590
    %1592 = vst [vmem:[#allocation2 + $0x38] sm:$0xff] %v1591
    %v1593 = vld [vmem:[%s5] sm:$0xff]
    %v1594 = vld [vmem:[#allocation2] sm:$0xff]
    %v1595 = vld [vmem:[#allocation2 + $0x8] sm:$0xff]
    %v1596 = vld [vmem:[#allocation2 + $0x10] sm:$0xff]
    %v1597 = vld [vmem:[#allocation2 + $0x18] sm:$0xff]
    %v1598 = vld [vmem:[#allocation2 + $0x20] sm:$0xff]
    %v1599 = vld [vmem:[#allocation2 + $0x28] sm:$0xff]
    %v1600 = vld [vmem:[#allocation2 + $0x30] sm:$0xff]
    %v1601 = vld [vmem:[#allocation2 + $0x38] sm:$0xff]
    %vm1602 = vcmask 523264
    %v1604 = vsel %vm1602, %v1593, 0
    %1606 = vmatpush.msra.mxu0 0.0
    %1607 = vmatpush.msra.mxu0 0.0
    %1608 = vmatpush.msra.mxu0 0.0
    %1609 = vmatpush.msra.mxu0 0.0
    %1610 = vmatpush.msra.mxu0 0.0
    %1611 = vmatpush.msra.mxu0 0.0
    %1612 = vmatpush.msra.mxu0 0.0
    %1613 = vmatpush.msra.mxu0 0.0
    %1614 = vmatpush.msra.mxu0 %v1601
    %1615 = vmatpush.msra.mxu0 %v1600
    %1616 = vmatpush.msra.mxu0 %v1599
    %1617 = vmatpush.msra.mxu0 %v1598
    %1618 = vmatpush.msra.mxu0 %v1597
    %1619 = vmatpush.msra.mxu0 %v1596
    %1620 = vmatpush.msra.mxu0 %v1595
    %1621 = vmatpush.msra.mxu0 %v1594
    %1622 = vmatmul.f32.gmra.mxu0 %v1604
    %v1623 = vpop.f32.mrf.mxu0
    %v1624 = vadd.f32 0.0, %v1623
    %1625 = vdwg.mxu0
    %v1626 = vld [vmem:[%s6] sm:$0xff]
    %v1627 = vld [vmem:[%s6 + $0x8] sm:$0xff]
    %v1628 = vld [vmem:[%s6 + $0x10] sm:$0xff]
    %v1629 = vld [vmem:[%s6 + $0x18] sm:$0xff]
    %v1630 = vld [vmem:[%s6 + $0x20] sm:$0xff]
    %v1631 = vld [vmem:[%s6 + $0x28] sm:$0xff]
    %v1632 = vld [vmem:[%s6 + $0x30] sm:$0xff]
    %v1633 = vld [vmem:[%s6 + $0x38] sm:$0xff]
    %v1634 = vld [vmem:[%s6 + $0x40] sm:$0xff]
    %v1635 = vld [vmem:[%s6 + $0x48] sm:$0xff]
    %v1636 = vld [vmem:[%s6 + $0x50] sm:$0xff]
    %v1637 = vld [vmem:[%s6 + $0x58] sm:$0xff]
    %v1638 = vld [vmem:[%s6 + $0x60] sm:$0xff]
    %v1639 = vld [vmem:[%s6 + $0x68] sm:$0xff]
    %v1640 = vld [vmem:[%s6 + $0x70] sm:$0xff]
    %v1641 = vld [vmem:[%s6 + $0x78] sm:$0xff]
    %v1642 = vld [vmem:[%s7] sm:$0x1]
    %v1644 = vperm.slane %v1642, 0
    %1646 = vmatpush.msra.mxu0 %v1641
    %1647 = vmatpush.msra.mxu0 %v1640
    %1648 = vmatpush.msra.mxu0 %v1639
    %1649 = vmatpush.msra.mxu0 %v1638
    %1650 = vmatpush.msra.mxu0 %v1637
    %1651 = vmatpush.msra.mxu0 %v1636
    %1652 = vmatpush.msra.mxu0 %v1635
    %1653 = vmatpush.msra.mxu0 %v1634
    %1654 = vmatpush.msra.mxu0 %v1633
    %1655 = vmatpush.msra.mxu0 %v1632
    %1656 = vmatpush.msra.mxu0 %v1631
    %1657 = vmatpush.msra.mxu0 %v1630
    %1658 = vmatpush.msra.mxu0 %v1629
    %1659 = vmatpush.msra.mxu0 %v1628
    %1660 = vmatpush.msra.mxu0 %v1627
    %1661 = vmatpush.msra.mxu0 %v1626
    %1662 = vmatmul.f32.gmra.mxu0 %v1624
    %v1663 = vpop.f32.mrf.mxu0
    %v1664 = vadd.f32 %v1644, %v1663
    %1665 = vdwg.mxu0
    %v1666 = vmax.f32 %v1664, 0.0
    %v1667 = vld [vmem:[%s8] sm:$0xff]
    %v1668 = vld [vmem:[%s8 + $0x8] sm:$0xff]
    %v1669 = vld [vmem:[%s8 + $0x10] sm:$0xff]
    %v1670 = vld [vmem:[%s8 + $0x18] sm:$0xff]
    %v1671 = vld [vmem:[%s8 + $0x20] sm:$0xff]
    %v1672 = vld [vmem:[%s8 + $0x28] sm:$0xff]
    %v1673 = vld [vmem:[%s8 + $0x30] sm:$0xff]
    %v1674 = vld [vmem:[%s8 + $0x38] sm:$0xff]
    %v1675 = vld [vmem:[%s9] sm:$0x1]
    %v1677 = vperm.slane %v1675, 0
    %v1680 = vsel %vm1602, %v1666, 0
    %1682 = vmatpush.msra.mxu0 0.0
    %1683 = vmatpush.msra.mxu0 0.0
    %1684 = vmatpush.msra.mxu0 0.0
    %1685 = vmatpush.msra.mxu0 0.0
    %1686 = vmatpush.msra.mxu0 0.0
    %1687 = vmatpush.msra.mxu0 0.0
    %1688 = vmatpush.msra.mxu0 0.0
    %1689 = vmatpush.msra.mxu0 0.0
    %1690 = vmatpush.msra.mxu0 %v1674
    %1691 = vmatpush.msra.mxu0 %v1673
    %1692 = vmatpush.msra.mxu0 %v1672
    %1693 = vmatpush.msra.mxu0 %v1671
    %1694 = vmatpush.msra.mxu0 %v1670
    %1695 = vmatpush.msra.mxu0 %v1669
    %1696 = vmatpush.msra.mxu0 %v1668
    %1697 = vmatpush.msra.mxu0 %v1667
    %1698 = vmatmul.f32.gmra.mxu0 %v1680
    %v1699 = vpop.f32.mrf.mxu0
    %v1700 = vadd.f32 %v1677, %v1699
    %1701 = vdwg.mxu0
    %v1702 = vmax.f32 %v1700, 0.0
    %v1703 = vld [vmem:[%s10] sm:$0xff]
    %v1704 = vld [vmem:[%s10 + $0x8] sm:$0xff]
    %v1705 = vld [vmem:[%s10 + $0x10] sm:$0xff]
    %v1706 = vld [vmem:[%s10 + $0x18] sm:$0xff]
    %v1707 = vld [vmem:[%s10 + $0x20] sm:$0xff]
    %v1708 = vld [vmem:[%s10 + $0x28] sm:$0xff]
    %v1709 = vld [vmem:[%s11] sm:$0x1]
    %v1711 = vperm.slane %v1709, 0
    %vm1713 = vcmask 392192
    %v1715 = vsel %vm1713, %v1702, 0
    %1717 = vmatpush.msra.mxu0 0.0
    %1718 = vmatpush.msra.mxu0 0.0
    %1719 = vmatpush.msra.mxu0 0.0
    %1720 = vmatpush.msra.mxu0 0.0
    %1721 = vmatpush.msra.mxu0 0.0
    %1722 = vmatpush.msra.mxu0 0.0
    %1723 = vmatpush.msra.mxu0 0.0
    %1724 = vmatpush.msra.mxu0 0.0
    %1725 = vmatpush.msra.mxu0 0.0
    %1726 = vmatpush.msra.mxu0 0.0
    %1727 = vmatpush.msra.mxu0 %v1708
    %1728 = vmatpush.msra.mxu0 %v1707
    %1729 = vmatpush.msra.mxu0 %v1706
    %1730 = vmatpush.msra.mxu0 %v1705
    %1731 = vmatpush.msra.mxu0 %v1704
    %1732 = vmatpush.msra.mxu0 %v1703
    %1733 = vmatmul.f32.gmra.mxu0 %v1715
    %v1734 = vpop.f32.mrf.mxu0
    %v1735 = vadd.f32 %v1711, %v1734
    %1736 = vdwg.mxu0
    %vm1737 = vcmask 121856
    %v1738 = vsel %vm1737, %v1735, -inf
    %1739 = vmax.xlane.f32.xlu0 %v1738
    %v1740 = vpop.xlane.xlu0 %1739
    %v1741 = vsub.f32 %v1735, %v1740
    %v1742 = vmul.f32 %v1741, 1.442695
    %v1743 = vpow.pop %v1742
    %v1744 = vsel %vm1737, %v1743, 0.0
    %1745 = vadd.xlane.f32.xlu0 %v1744
    %v1746 = vpop.xlane.xlu0 %1745
    %v1747 = vrcp.pop %v1746
    %v1748 = vmul.f32 %v1746, %v1747
    %v1749 = vsub.f32 1.0, %v1748
    %v1750 = vmul.f32 %v1747, %v1749
    %v1751 = vadd.f32 %v1747, %v1750
    %vm1752 = vweird.f32 %v1746
    %vm1753 = vweird.f32 %v1747
    %vm1754 = vmor %vm1752, %vm1753
    %v1755 = vsel %vm1754, %v1747, %v1751
    %v1756 = vand.u32 2147483647, %v1746
    %vm1757 = vcmp.eq.f32.partialorder %v1756, 8.507059e+37
    %v1758 = vand.u32 %v1746, 2147483648
    %v1759 = vor.u32 1.1754944e-38, %v1758
    %v1760 = vsel %vm1757, %v1759, %v1755
    %v1761 = vmul.f32 %v1743, %v1760
    %v1762 = vsel %vm1737, %v1761, 0.0
    %v1763 = vsel %vm1737, %v1735, 0.0
    %v1764 = vsel %vm1713, %v1702, 0.0
    %1765 = vst [vmem:[%s12] sm:$0xff] %v1762
    %1766 = vst [vmem:[%s12 + $0x8] sm:$0xff] %v1763
    %1767 = vst [vmem:[%s12 + $0x10] sm:$0xff] %v1764
    // Predicated region
    $region54: #{_forward_impl.1} parent=1 // pred_check
      _
    $region55: #{_forward_impl.1} parent=1 // pred_check_branch
      %1769 = sbr.rel (0) target = $region57
    $region56: #{_forward_impl.1} parent=1 // pred_region
      _
    $region57: #{_forward_impl.1} parent=1 // pred_fallthru
      _
    // Predicated region
    $region58: #{_forward_impl.1} parent=1 // pred_check
      _
    $region59: #{_forward_impl.1} parent=1 // pred_check_branch
      %1771 = sbr.rel (0) target = $region61
    $region60: #{_forward_impl.1} parent=1 // pred_region
      _
    $region61: #{_forward_impl.1} parent=1 // pred_fallthru
      _
    %1772 = vsyncpa [#allocation5], 1

</llo_original>
